<compile_context>
chip_gen: v5e
topology: v5e:2x2
jax: 0.10.0
libtpu: 0.0.40
codegen_flags: <defaults>
</compile_context>

<pallas_src>
import math
import functools

import jax
import jax.numpy as jnp
from jax.experimental import pallas as pl
from jax.experimental.pallas import tpu as pltpu

GELU_C = math.sqrt(2.0 / math.pi)


def _mlp_kernel(x_ref, w1_ref, b1_ref, w2_ref, b2_ref, o_ref, *, n_sub, ts):
    # x_ref : (tm, C)   bf16 token tile (same tile across the H axis)
    # w1_ref: (C, th)   bf16 c_fc weight chunk
    # b1_ref: (1, th)   f32  c_fc bias chunk
    # w2_ref: (th, C)   bf16 c_proj weight chunk
    # b2_ref: (1, C)    f32  c_proj bias
    # o_ref : (tm, C)   f32  output tile == accumulator (resident across the H axis)
    h_idx = pl.program_id(1)

    @pl.when(h_idx == 0)
    def _():
        # Seed the resident output block with the c_proj bias; then just accumulate.
        o_ref[...] = jnp.broadcast_to(b2_ref[...], o_ref.shape).astype(o_ref.dtype)

    x = x_ref[...]
    acc = jnp.zeros(o_ref.shape, jnp.float32)
    # Static unrolled sub-chunk loop: matmul1 (MXU) of sub-chunk k+1 can issue while the
    # GELU (VALU/EUP) of sub-chunk k runs and its matmul2 accumulates.
    for k in range(n_sub):
        lo, hi = k * ts, (k + 1) * ts
        # c_fc sub-chunk: (tm, ts), bf16 operands -> f32 accumulate (MXU)
        h = jnp.dot(x, w1_ref[:, lo:hi], preferred_element_type=jnp.float32)
        h = h + b1_ref[:, lo:hi]
        # new_gelu (tanh approximation) in f32; tanh goes to the EUP slot.
        h2 = h * h
        g = 0.5 * h * (1.0 + jnp.tanh(GELU_C * h * (1.0 + 0.044715 * h2)))
        # c_proj sub-chunk: accumulate g @ W2 sub-chunk (MXU, f32 accumulate).
        acc = acc + jnp.dot(g.astype(w2_ref.dtype), w2_ref[lo:hi, :],
                            preferred_element_type=jnp.float32)

    # Single (tm, C) read-modify-write of the resident output block per grid step.
    o_ref[...] += acc


def _choose_tile(n, target, multiple):
    """Largest t <= target that is a multiple of `multiple` and divides n; else full n."""
    if n <= multiple:
        return n
    t = min(target, n)
    t = max((t // multiple) * multiple, multiple)
    while t > multiple and n % t != 0:
        t -= multiple
    if n % t != 0:
        # TODO(synk): ragged dims fall back to one full tile; prefer cdiv grid + masked
        # edge tiles for very large awkward M.
        t = n
    return t


def _device_kind():
    try:
        return jax.devices()[0].device_kind.lower()
    except Exception:  # pragma: no cover - e.g. no devices during AOT tracing
        return ""


def _gen_config(M):
    """(tm_target, th_target, vmem_limit_bytes, want_two_core_split) per generation."""
    kind = _device_kind()
    if "v7" in kind:
        #  ~310 flops/byte balance, 64 MiB VMEM, 2 TCs/chip.
        return 512, 1024, 48 * 1024 * 1024, True
    if "v6" in kind:
        #  ~650 flops/byte balance, 128 MiB VMEM.
        return 1024, 1024, 100 * 1024 * 1024, False
    if "v5" in kind:
        #  ~240 flops/byte balance, 128 MiB VMEM (plenty).
        return 1024, 1024, 100 * 1024 * 1024, False
    # Unknown / older generation: be conservative on VMEM.
    return 512, 1024, 64 * 1024 * 1024, False


def _vmem_estimate(tm, th, ts, C):
    """Rough double-buffered footprint + in-kernel f32 temporaries."""
    dbuf = 2 * (tm * C * 2      # x tile (bf16)
                + C * th * 2    # W1 chunk (bf16)
                + th * C * 2    # W2 chunk (bf16)
                + tm * C * 4    # output block (f32)
                + th * 4        # b1 chunk (f32)
                + C * 4)        # b2 (f32)
    temps = 8 * tm * ts * 4 + tm * C * 4   # h/h2/g sub-chunk temps + acc
    return dbuf + temps


@functools.partial(jax.jit, static_argnames=("tm", "th"))
def mlp_forward(x, w1, b1, w2, b2, *, tm=None, th=None):
    """x: (B, T, C).  w1: (C, 4C), b1: (4C,), w2: (4C, C), b2: (C,).

    Weights are ideally pre-cast to bf16 once (init_mlp_params does this); the astype
    below is then a no-op and no per-call convert is emitted."""
    B, T, C = x.shape
    H = w1.shape[1]
    M = B * T

    tm_target, th_target, vmem_limit, two_core = _gen_config(M)
    if tm is None:
        tm = tm_target
    if th is None:
        th = th_target

    tm = _choose_tile(M, tm, 16)    # bf16 sublane packing -> multiple of 16 (or full M)
    th = _choose_tile(H, th, 128)   # lane tiling -> multiple of 128 (or full H)

    # v7x: keep the parallel axis >= 2 tiles so both TensorCores get work.
    if two_core and (M // tm) < 2 and M >= 32:
        tm = _choose_tile(M, max(tm // 2, 16), 16)

    # In-body sub-chunk width for MXU/VPU/EUP interleave.
    ts = _choose_tile(th, 256, 128)

    # Shrink tiles if the estimated footprint would blow the per-generation VMEM budget.
    for _ in range(8):
        if _vmem_estimate(tm, th, ts, C) < 0.75 * vmem_limit:
            break
        if tm >= th and tm > 128:
            new_tm = _choose_tile(M, max(tm // 2, 16), 16)
            if new_tm == tm:
                break
            tm = new_tm
        elif th > 256:
            new_th = _choose_tile(H, max(th // 2, 128), 128)
            if new_th == th:
                break
            th = new_th
            ts = _choose_tile(th, 256, 128)
        else:
            break

    n_sub = th // ts

    x2d = x.reshape(M, C).astype(jnp.bfloat16)
    w1b = w1.astype(jnp.bfloat16)          # no-op if params already bf16
    w2b = w2.astype(jnp.bfloat16)
    b1_2d = b1.reshape(1, H).astype(jnp.float32)
    b2_2d = b2.reshape(1, C).astype(jnp.float32)

    grid_m = M // tm
    cost = pl.CostEstimate(
        flops=4 * M * C * H,                      # two matmuls, 2*M*C*H flops each
        transcendentals=M * H,                    # one tanh per hidden activation
        bytes_accessed=(M * C * 2                 # x read once
                        + grid_m * (C * H * 2 + H * C * 2 + H * 4 + C * 4)  # weights re-streamed
                        + M * C * 4),             # f32 output
    )

    out = pl.pallas_call(
        functools.partial(_mlp_kernel, n_sub=n_sub, ts=ts),
        out_shape=jax.ShapeDtypeStruct((M, C), jnp.float32),
        grid_spec=pltpu.PrefetchScalarGridSpec(
            num_scalar_prefetch=0,
            grid=(grid_m, H // th),                # reduction (H) axis last
            in_specs=[
                pl.BlockSpec((tm, C), lambda i, h: (i, 0)),   # x token tile
                pl.BlockSpec((C, th), lambda i, h: (0, h)),   # W1 chunk
                pl.BlockSpec((1, th), lambda i, h: (0, h)),   # b1 chunk
                pl.BlockSpec((th, C), lambda i, h: (h, 0)),   # W2 chunk
                pl.BlockSpec((1, C), lambda i, h: (0, 0)),    # b2
            ],
            out_specs=pl.BlockSpec((tm, C), lambda i, h: (i, 0)),
        ),
        compiler_params=pltpu.CompilerParams(
            dimension_semantics=("parallel", "arbitrary"),
            vmem_limit_bytes=vmem_limit,
        ),
        cost_estimate=cost,
    )(x2d, w1b, b1_2d, w2b, b2_2d)

    return out.reshape(B, T, C).astype(x.dtype)


def init_mlp_params(key, n_embed):
    """Deterministic init matching nn.Linear's default U(-1/sqrt(fan_in), 1/sqrt(fan_in)).
    Weights are stored transposed relative to PyTorch: W1 (C, 4C), W2 (4C, C).
    Returns (f32 params for reference, bf16 weight copies for the kernel)."""
    hidden = 4 * n_embed
    k1, k2, k3, k4 = jax.random.split(key, 4)
    lim1 = 1.0 / math.sqrt(n_embed)
    lim2 = 1.0 / math.sqrt(hidden)
    w1 = jax.random.uniform(k1, (n_embed, hidden), jnp.float32, -lim1, lim1)
    b1 = jax.random.uniform(k2, (hidden,), jnp.float32, -lim1, lim1)
    w2 = jax.random.uniform(k3, (hidden, n_embed), jnp.float32, -lim2, lim2)
    b2 = jax.random.uniform(k4, (n_embed,), jnp.float32, -lim2, lim2)
    # Cast weights to bf16 ONCE here so the jitted forward does not re-convert per call.
    return (w1, b1, w2, b2), (w1.astype(jnp.bfloat16), w2.astype(jnp.bfloat16))


def mlp_reference(x, w1, b1, w2, b2):
    """Pure-JAX f32 reference of the PyTorch forward (eval mode)."""
    h = x @ w1 + b1
    g = 0.5 * h * (1.0 + jnp.tanh(GELU_C * (h + 0.044715 * h**3)))
    return g @ w2 + b2


if __name__ == "__main__":
    # Small shapes consistent with the module: batch=2, seq=8, n_embed=384 (hidden=1536).
    B, T, C = 2, 8, 384
    key = jax.random.PRNGKey(0)
    kx, kp = jax.random.split(key)
    x = jax.random.normal(kx, (B, T, C), jnp.float32)
    (w1, b1, w2, b2), (w1_bf16, w2_bf16) = init_mlp_params(kp, C)

    y = mlp_forward(x, w1_bf16, b1, w2_bf16, b2)
    y = jax.block_until_ready(y)

    y_ref = mlp_reference(x, w1, b1, w2, b2)
    assert y.shape == (B, T, C)
    max_err = float(jnp.max(jnp.abs(y - y_ref)))
    # MXU operands are bf16 (f32 accumulation), so tolerance is looser than a pure-f32 path.
    assert jnp.allclose(y, y_ref, atol=2e-2, rtol=2e-2), f"mismatch vs reference (max|err|={max_err})"

    print("KERNEL_OK")
</pallas_src>

<mosaic_0001>
module attributes {stable_mosaic.version = 11 : i64} {
  func.func @_mlp_kernel(%arg0: i32, %arg1: i32, %arg2: memref<16x384xbf16, #tpu.memory_space<vmem>>, %arg3: memref<384x768xbf16, #tpu.memory_space<vmem>>, %arg4: memref<1x768xf32, #tpu.memory_space<vmem>>, %arg5: memref<768x384xbf16, #tpu.memory_space<vmem>>, %arg6: memref<1x384xf32, #tpu.memory_space<vmem>>, %arg7: memref<16x384xf32, #tpu.memory_space<vmem>>) attributes {dimension_semantics = [#tpu.dimension_semantics<parallel>, #tpu.dimension_semantics<arbitrary>], iteration_bounds = array<i64: 1, 2>, scalar_prefetch = 0 : i64, scratch_operands = 0 : i64, tpu.core_type = #tpu.core_type<tc>, window_params = [{transform_indices = @transform_0, window_bounds = array<i64: 16, 384>}, {transform_indices = @transform_1, window_bounds = array<i64: 384, 768>}, {transform_indices = @transform_2, window_bounds = array<i64: 1, 768>}, {transform_indices = @transform_3, window_bounds = array<i64: 768, 384>}, {pipeline_mode = #tpu.pipeline_mode<synchronous>, transform_indices = @transform_4, window_bounds = array<i64: 1, 384>}, {transform_indices = @transform_5, window_bounds = array<i64: 16, 384>}]} {
    %c0_i32 = arith.constant 0 : i32
    %0 = arith.cmpi eq, %arg1, %c0_i32 : i32
    %1 = arith.extui %0 : i1 to i32
    %c0_i32_0 = arith.constant 0 : i32
    %2 = arith.cmpi ne, %1, %c0_i32_0 : i32
    scf.if %2 {
      %c0_43 = arith.constant 0 : index
      %c0_44 = arith.constant 0 : index
      %77 = vector.load %arg6[%c0_43, %c0_44] : memref<1x384xf32, #tpu.memory_space<vmem>>, vector<1x384xf32>
      %78 = vector.shape_cast %77 : vector<1x384xf32> to vector<1x384xf32>
      %79 = vector.broadcast %78 : vector<1x384xf32> to vector<16x384xf32>
      %c0_45 = arith.constant 0 : index
      %c0_46 = arith.constant 0 : index
      %80 = vector.load %arg7[%c0_45, %c0_46] : memref<16x384xf32, #tpu.memory_space<vmem>>, vector<16x384xf32>
      tpu.vector_store %arg7[%c0_45, %c0_46], %79 {strides = array<i32>} : memref<16x384xf32, #tpu.memory_space<vmem>>, vector<16x384xf32>,
    } else {
    }
    %c0 = arith.constant 0 : index
    %c0_1 = arith.constant 0 : index
    %3 = vector.load %arg2[%c0, %c0_1] : memref<16x384xbf16, #tpu.memory_space<vmem>>, vector<16x384xbf16>
    %cst = arith.constant 0.000000e+00 : f32
    %4 = vector.broadcast %cst : f32 to vector<16x384xf32>
    %c0_2 = arith.constant 0 : index
    %c0_3 = arith.constant 0 : index
    %5 = vector.load %arg3[%c0_2, %c0_3] : memref<384x768xbf16, #tpu.memory_space<vmem>>, vector<384x256xbf16>
    %cst_4 = arith.constant dense<0.000000e+00> : vector<16x256xf32>
    %6 = tpu.matmul %3, %5, %cst_4 {dimension_numbers = #tpu.dot_dimension_numbers<[1], [0], [0], [1], [0, 0, 1, 1], [], []>} : vector<16x384xbf16>, vector<384x256xbf16>, vector<16x256xf32> -> vector<16x256xf32>
    %c0_5 = arith.constant 0 : index
    %c0_6 = arith.constant 0 : index
    %7 = vector.load %arg4[%c0_5, %c0_6] : memref<1x768xf32, #tpu.memory_space<vmem>>, vector<1x256xf32>
    %8 = vector.broadcast %7 : vector<1x256xf32> to vector<16x256xf32>
    %9 = arith.addf %6, %8 : vector<16x256xf32>
    %10 = arith.mulf %9, %9 : vector<16x256xf32>
    %cst_7 = arith.constant 5.000000e-01 : f32
    %11 = vector.broadcast %cst_7 : f32 to vector<16x256xf32>
    %12 = arith.mulf %11, %9 : vector<16x256xf32>
    %cst_8 = arith.constant 0.797884583 : f32
    %13 = vector.broadcast %cst_8 : f32 to vector<16x256xf32>
    %14 = arith.mulf %13, %9 : vector<16x256xf32>
    %cst_9 = arith.constant 4.471500e-02 : f32
    %15 = vector.broadcast %cst_9 : f32 to vector<16x256xf32>
    %16 = arith.mulf %15, %10 : vector<16x256xf32>
    %cst_10 = arith.constant 1.000000e+00 : f32
    %17 = vector.broadcast %cst_10 : f32 to vector<16x256xf32>
    %18 = arith.addf %17, %16 : vector<16x256xf32>
    %19 = arith.mulf %14, %18 : vector<16x256xf32>
    %20 = math.tanh %19 : vector<16x256xf32>
    %cst_11 = arith.constant 1.000000e+00 : f32
    %21 = vector.broadcast %cst_11 : f32 to vector<16x256xf32>
    %22 = arith.addf %21, %20 : vector<16x256xf32>
    %23 = arith.mulf %12, %22 : vector<16x256xf32>
    %24 = arith.truncf %23 : vector<16x256xf32> to vector<16x256xbf16>
    %c0_12 = arith.constant 0 : index
    %c0_13 = arith.constant 0 : index
    %25 = vector.load %arg5[%c0_12, %c0_13] : memref<768x384xbf16, #tpu.memory_space<vmem>>, vector<256x384xbf16>
    %cst_14 = arith.constant dense<0.000000e+00> : vector<16x384xf32>
    %26 = tpu.matmul %24, %25, %cst_14 {dimension_numbers = #tpu.dot_dimension_numbers<[1], [0], [0], [1], [0, 0, 1, 1], [], []>} : vector<16x256xbf16>, vector<256x384xbf16>, vector<16x384xf32> -> vector<16x384xf32>
    %27 = arith.addf %4, %26 : vector<16x384xf32>
    %c0_15 = arith.constant 0 : index
    %c256 = arith.constant 256 : index
    %28 = vector.load %arg3[%c0_15, %c256] : memref<384x768xbf16, #tpu.memory_space<vmem>>, vector<384x256xbf16>
    %cst_16 = arith.constant dense<0.000000e+00> : vector<16x256xf32>
    %29 = tpu.matmul %3, %28, %cst_16 {dimension_numbers = #tpu.dot_dimension_numbers<[1], [0], [0], [1], [0, 0, 1, 1], [], []>} : vector<16x384xbf16>, vector<384x256xbf16>, vector<16x256xf32> -> vector<16x256xf32>
    %c0_17 = arith.constant 0 : index
    %c256_18 = arith.constant 256 : index
    %30 = vector.load %arg4[%c0_17, %c256_18] : memref<1x768xf32, #tpu.memory_space<vmem>>, vector<1x256xf32>
    %31 = vector.broadcast %30 : vector<1x256xf32> to vector<16x256xf32>
    %32 = arith.addf %29, %31 : vector<16x256xf32>
    %33 = arith.mulf %32, %32 : vector<16x256xf32>
    %cst_19 = arith.constant 5.000000e-01 : f32
    %34 = vector.broadcast %cst_19 : f32 to vector<16x256xf32>
    %35 = arith.mulf %34, %32 : vector<16x256xf32>
    %cst_20 = arith.constant 0.797884583 : f32
    %36 = vector.broadcast %cst_20 : f32 to vector<16x256xf32>
    %37 = arith.mulf %36, %32 : vector<16x256xf32>
    %cst_21 = arith.constant 4.471500e-02 : f32
    %38 = vector.broadcast %cst_21 : f32 to vector<16x256xf32>
    %39 = arith.mulf %38, %33 : vector<16x256xf32>
    %cst_22 = arith.constant 1.000000e+00 : f32
    %40 = vector.broadcast %cst_22 : f32 to vector<16x256xf32>
    %41 = arith.addf %40, %39 : vector<16x256xf32>
    %42 = arith.mulf %37, %41 : vector<16x256xf32>
    %43 = math.tanh %42 : vector<16x256xf32>
    %cst_23 = arith.constant 1.000000e+00 : f32
    %44 = vector.broadcast %cst_23 : f32 to vector<16x256xf32>
    %45 = arith.addf %44, %43 : vector<16x256xf32>
    %46 = arith.mulf %35, %45 : vector<16x256xf32>
    %47 = arith.truncf %46 : vector<16x256xf32> to vector<16x256xbf16>
    %c256_24 = arith.constant 256 : index
    %c0_25 = arith.constant 0 : index
    %48 = vector.load %arg5[%c256_24, %c0_25] : memref<768x384xbf16, #tpu.memory_space<vmem>>, vector<256x384xbf16>
    %cst_26 = arith.constant dense<0.000000e+00> : vector<16x384xf32>
    %49 = tpu.matmul %47, %48, %cst_26 {dimension_numbers = #tpu.dot_dimension_numbers<[1], [0], [0], [1], [0, 0, 1, 1], [], []>} : vector<16x256xbf16>, vector<256x384xbf16>, vector<16x384xf32> -> vector<16x384xf32>
    %50 = arith.addf %27, %49 : vector<16x384xf32>
    %c0_27 = arith.constant 0 : index
    %c512 = arith.constant 512 : index
    %51 = vector.load %arg3[%c0_27, %c512] : memref<384x768xbf16, #tpu.memory_space<vmem>>, vector<384x256xbf16>
    %cst_28 = arith.constant dense<0.000000e+00> : vector<16x256xf32>
    %52 = tpu.matmul %3, %51, %cst_28 {dimension_numbers = #tpu.dot_dimension_numbers<[1], [0], [0], [1], [0, 0, 1, 1], [], []>} : vector<16x384xbf16>, vector<384x256xbf16>, vector<16x256xf32> -> vector<16x256xf32>
    %c0_29 = arith.constant 0 : index
    %c512_30 = arith.constant 512 : index
    %53 = vector.load %arg4[%c0_29, %c512_30] : memref<1x768xf32, #tpu.memory_space<vmem>>, vector<1x256xf32>
    %54 = vector.broadcast %53 : vector<1x256xf32> to vector<16x256xf32>
    %55 = arith.addf %52, %54 : vector<16x256xf32>
    %56 = arith.mulf %55, %55 : vector<16x256xf32>
    %cst_31 = arith.constant 5.000000e-01 : f32
    %57 = vector.broadcast %cst_31 : f32 to vector<16x256xf32>
    %58 = arith.mulf %57, %55 : vector<16x256xf32>
    %cst_32 = arith.constant 0.797884583 : f32
    %59 = vector.broadcast %cst_32 : f32 to vector<16x256xf32>
    %60 = arith.mulf %59, %55 : vector<16x256xf32>
    %cst_33 = arith.constant 4.471500e-02 : f32
    %61 = vector.broadcast %cst_33 : f32 to vector<16x256xf32>
    %62 = arith.mulf %61, %56 : vector<16x256xf32>
    %cst_34 = arith.constant 1.000000e+00 : f32
    %63 = vector.broadcast %cst_34 : f32 to vector<16x256xf32>
    %64 = arith.addf %63, %62 : vector<16x256xf32>
    %65 = arith.mulf %60, %64 : vector<16x256xf32>
    %66 = math.tanh %65 : vector<16x256xf32>
    %cst_35 = arith.constant 1.000000e+00 : f32
    %67 = vector.broadcast %cst_35 : f32 to vector<16x256xf32>
    %68 = arith.addf %67, %66 : vector<16x256xf32>
    %69 = arith.mulf %58, %68 : vector<16x256xf32>
    %70 = arith.truncf %69 : vector<16x256xf32> to vector<16x256xbf16>
    %c512_36 = arith.constant 512 : index
    %c0_37 = arith.constant 0 : index
    %71 = vector.load %arg5[%c512_36, %c0_37] : memref<768x384xbf16, #tpu.memory_space<vmem>>, vector<256x384xbf16>
    %cst_38 = arith.constant dense<0.000000e+00> : vector<16x384xf32>
    %72 = tpu.matmul %70, %71, %cst_38 {dimension_numbers = #tpu.dot_dimension_numbers<[1], [0], [0], [1], [0, 0, 1, 1], [], []>} : vector<16x256xbf16>, vector<256x384xbf16>, vector<16x384xf32> -> vector<16x384xf32>
    %73 = arith.addf %50, %72 : vector<16x384xf32>
    %c0_39 = arith.constant 0 : index
    %c0_40 = arith.constant 0 : index
    %74 = vector.load %arg7[%c0_39, %c0_40] : memref<16x384xf32, #tpu.memory_space<vmem>>, vector<16x384xf32>
    %75 = arith.addf %74, %73 : vector<16x384xf32>
    %c0_41 = arith.constant 0 : index
    %c0_42 = arith.constant 0 : index
    %76 = vector.load %arg7[%c0_41, %c0_42] : memref<16x384xf32, #tpu.memory_space<vmem>>, vector<16x384xf32>
    tpu.vector_store %arg7[%c0_41, %c0_42], %75 {strides = array<i32>} : memref<16x384xf32, #tpu.memory_space<vmem>>, vector<16x384xf32>,
    return
  }
  func.func @transform_0(%arg0: i32, %arg1: i32) -> (i32, i32) {
    %c0_i32 = arith.constant 0 : i32
    %c0_i32_0 = arith.constant 0 : i32
    return %arg0, %c0_i32 : i32, i32
  }
  func.func @transform_1(%arg0: i32, %arg1: i32) -> (i32, i32) {
    %c0_i32 = arith.constant 0 : i32
    %c0_i32_0 = arith.constant 0 : i32
    return %c0_i32, %arg1 : i32, i32
  }
  func.func @transform_2(%arg0: i32, %arg1: i32) -> (i32, i32) {
    %c0_i32 = arith.constant 0 : i32
    %c0_i32_0 = arith.constant 0 : i32
    return %c0_i32, %arg1 : i32, i32
  }
  func.func @transform_3(%arg0: i32, %arg1: i32) -> (i32, i32) {
    %c0_i32 = arith.constant 0 : i32
    %c0_i32_0 = arith.constant 0 : i32
    return %arg1, %c0_i32 : i32, i32
  }
  func.func @transform_4(%arg0: i32, %arg1: i32) -> (i32, i32) {
    %c0_i32 = arith.constant 0 : i32
    %c0_i32_0 = arith.constant 0 : i32
    %c0_i32_1 = arith.constant 0 : i32
    return %c0_i32, %c0_i32_0 : i32, i32
  }
  func.func @transform_5(%arg0: i32, %arg1: i32) -> (i32, i32) {
    %c0_i32 = arith.constant 0 : i32
    %c0_i32_0 = arith.constant 0 : i32
    return %arg0, %c0_i32 : i32, i32
  }
}

</mosaic_0001>

<llo_original>
// kernel: mlp_forward.1
$region0: #{mlp_forward.1}
  #allocation0 [shape = 'u32[]', space=smem, size = 0x4, offset = 0x4, fixed_abs, tag = 'smem constant byte address 0x4 - core index']
  #allocation1 [shape = 'u32[72,128]{1,0:T(1,128)}', space=vmem, size = 0x9000, scoped, tag = 'internal scratch']
  %s0 = inlined_call_operand.vmem [shape: bf16[16,384], index: 0, kind: input, shape index: {}]
  %s1 = inlined_call_operand.hbm [shape: bf16[384,1536], index: 1, kind: input, shape index: {}]
  %s2 = inlined_call_operand.vmem [shape: f32[1,1536], index: 2, kind: input, shape index: {}]
  %s3 = inlined_call_operand.hbm [shape: bf16[1536,384], index: 3, kind: input, shape index: {}]
  %s4 = inlined_call_operand.vmem [shape: f32[1,384], index: 4, kind: input, shape index: {}]
  %s5 = inlined_call_operand.hbm [shape: f32[16,384], index: 5, kind: output, shape index: {}]
  %s6 = sld [smem:[#allocation0]]
  $region65: #{mlp_forward.1} parent=0
    _
  %s8 = ssub.s32 1, %s6
  %s9 = scalar_select 0, %s8, %s6
  $region1: #{mlp_forward.1} parent=0
    #allocation2 [shape = 'u8[1179648]{0}', space=vmem, size = 0x120000, scoped, tag = 'input window, operand 1']
    #allocation3 [shape = 's32[2]{0}', space=sflag, size = 0x8, scoped, tag = 'scoped memory for mlp_forward.1']
    #allocation4 [shape = 's32[2]{0}', space=sflag, size = 0x8, scoped, tag = 'scoped memory for mlp_forward.1']
    #allocation5 [shape = 'u8[1179648]{0}', space=vmem, size = 0x120000, scoped, tag = 'input window, operand 3']
    #allocation6 [shape = 's32[2]{0}', space=sflag, size = 0x8, scoped, tag = 'scoped memory for mlp_forward.1']
    #allocation7 [shape = 'u8[24576]{0}', space=vmem, size = 0x6000, scoped, tag = 'output window, operand 0, single buffered']
    %10 = vsyncpa [#allocation3], 0
    %s11 = scalar_lea.sflag [#allocation3], 1
    %12 = vsyncpa %s11, 0
    %13 = vsyncpa [#allocation6], 0
    %s14 = scalar_lea.sflag [#allocation6], 1
    %15 = vsyncpa %s14, 0
    %16 = vsyncpa [#allocation4], 0
    loop: start=0, step=1, limit=4
    $region2: #{mlp_forward.1} parent=1 // loop_pre_header
      _
    $region3: #{mlp_forward.1} parent=1 // loop_header
      %s18 = sphi 0, %s22
      %p19 = scmp.ge.s32.totalorder %s18, 4
      %s25 = sphi 0, %s37
      %s26 = sphi 0, %s33
      %s27 = sphi 0, %s25
      %s28 = sphi 0, %s26
      %s29 = sphi 0, %s27
      %s30 = sphi 0, %s28
      %s40 = sphi 0, %s42
      %s43 = sphi 0, %s40
      %s44 = sphi 0, %s43
      %s60 = sphi 0, %s44
      %s66 = sphi 0, %s68
      %s69 = sphi 0, %s66
      %s70 = sphi 0, %s69
      %s86 = sphi 0, %s70
      %s92 = sphi 0, %s94
      %s95 = sphi 0, %s92
      %s96 = sphi 0, %s95
      %s112 = sphi 0, %s96
      %s118 = sphi 0, %s120
      %s121 = sphi 0, %s118
      %s122 = sphi 0, %s121
      %s138 = sphi 0, %s122
      %s142 = sphi 0, %s142
      %s144 = sphi 0, %s142
      %s145 = sphi 0, %s144
      %s159 = sphi 0, %s145
      %s165 = sphi 0, %s167
      %s168 = sphi 0, %s165
      %s169 = sphi 0, %s168
      %s185 = sphi 0, %s169
    $region4: #{mlp_forward.1} parent=1 // loop_header_branch
      %21 = sbr.rel (%p19) target = $region8
    $region5: #{mlp_forward.1} parent=1 // loop_body
      %s23 = ssub.s32 %s18, 1
      %s24 = ssub.s32 %s18, 2
      %s31 = sadd.s32 1, %s26
      %p32 = scmp.ge.s32.totalorder %s31, 2
      %s33 = scalar_select %p32, 0, %s31
      %s34 = sadd.s32 1, %s25
      %s35 = scalar_select %p32, %s34, %s25
      %p36 = scmp.ge.s32.totalorder %s35, 1
      %s37 = scalar_select %p36, 0, %s35
      %s38 = ssub.s32 %s25, %s37
      %p39 = scmp.eq.s32.totalorder %s38, 0
      %s41 = sadd.s32 %s40, 1
      %s42 = scalar_select %p39, %s40, %s41
      %p45 = pneg %p39
      %p46 = scmp.eq.s32.totalorder %s18, 1
      %p47 = por %p45, %p46
      %p48 = scmp.ne.s32.totalorder %s40, %s43
      %p49 = scmp.eq.s32.totalorder %s18, 0
      %p50 = por %p48, %p49
      %p51 = scmp.ne.s32.totalorder %s40, %s43
      %p52 = scmp.eq.s32.totalorder %s23, 1
      %p53 = por %p51, %p52
      %p54 = scmp.ne.s32.totalorder %s43, %s44
      %p55 = scmp.eq.s32.totalorder %s23, 0
      %p56 = por %p54, %p55
      %p57 = scmp.ne.s32.totalorder %s43, %s44
      %p58 = scmp.eq.s32.totalorder %s24, 1
      %p59 = por %p57, %p58
      %p61 = scmp.ne.s32.totalorder %s44, %s60
      %p62 = scmp.eq.s32.totalorder %s24, 0
      %p63 = por %p61, %p62
      %s64 = ssub.s32 %s26, %s33
      %p65 = scmp.eq.s32.totalorder %s64, 0
      %s67 = sadd.s32 %s66, 1
      %s68 = scalar_select %p65, %s66, %s67
      %p71 = pneg %p65
      %p72 = scmp.eq.s32.totalorder %s18, 1
      %p73 = por %p71, %p72
      %p74 = scmp.ne.s32.totalorder %s66, %s69
      %p75 = scmp.eq.s32.totalorder %s18, 0
      %p76 = por %p74, %p75
      %p77 = scmp.ne.s32.totalorder %s66, %s69
      %p78 = scmp.eq.s32.totalorder %s23, 1
      %p79 = por %p77, %p78
      %p80 = scmp.ne.s32.totalorder %s69, %s70
      %p81 = scmp.eq.s32.totalorder %s23, 0
      %p82 = por %p80, %p81
      %p83 = scmp.ne.s32.totalorder %s69, %s70
      %p84 = scmp.eq.s32.totalorder %s24, 1
      %p85 = por %p83, %p84
      %p87 = scmp.ne.s32.totalorder %s70, %s86
      %p88 = scmp.eq.s32.totalorder %s24, 0
      %p89 = por %p87, %p88
      %s90 = ssub.s32 %s26, %s33
      %p91 = scmp.eq.s32.totalorder %s90, 0
      %s93 = sadd.s32 %s92, 1
      %s94 = scalar_select %p91, %s92, %s93
      %p97 = pneg %p91
      %p98 = scmp.eq.s32.totalorder %s18, 1
      %p99 = por %p97, %p98
      %p100 = scmp.ne.s32.totalorder %s92, %s95
      %p101 = scmp.eq.s32.totalorder %s18, 0
      %p102 = por %p100, %p101
      %p103 = scmp.ne.s32.totalorder %s92, %s95
      %p104 = scmp.eq.s32.totalorder %s23, 1
      %p105 = por %p103, %p104
      %p106 = scmp.ne.s32.totalorder %s95, %s96
      %p107 = scmp.eq.s32.totalorder %s23, 0
      %p108 = por %p106, %p107
      %p109 = scmp.ne.s32.totalorder %s95, %s96
      %p110 = scmp.eq.s32.totalorder %s24, 1
      %p111 = por %p109, %p110
      %p113 = scmp.ne.s32.totalorder %s96, %s112
      %p114 = scmp.eq.s32.totalorder %s24, 0
      %p115 = por %p113, %p114
      %s116 = ssub.s32 %s26, %s33
      %p117 = scmp.eq.s32.totalorder %s116, 0
      %s119 = sadd.s32 %s118, 1
      %s120 = scalar_select %p117, %s118, %s119
      %p123 = pneg %p117
      %p124 = scmp.eq.s32.totalorder %s18, 1
      %p125 = por %p123, %p124
      %p126 = scmp.ne.s32.totalorder %s118, %s121
      %p127 = scmp.eq.s32.totalorder %s18, 0
      %p128 = por %p126, %p127
      %p129 = scmp.ne.s32.totalorder %s118, %s121
      %p130 = scmp.eq.s32.totalorder %s23, 1
      %p131 = por %p129, %p130
      %p132 = scmp.ne.s32.totalorder %s121, %s122
      %p133 = scmp.eq.s32.totalorder %s23, 0
      %p134 = por %p132, %p133
      %p135 = scmp.ne.s32.totalorder %s121, %s122
      %p136 = scmp.eq.s32.totalorder %s24, 1
      %p137 = por %p135, %p136
      %p139 = scmp.ne.s32.totalorder %s122, %s138
      %p140 = scmp.eq.s32.totalorder %s24, 0
      %p141 = por %p139, %p140
      %s143 = sadd.s32 %s142, 1
      %p146 = scmp.eq.s32.totalorder %s18, 1
      %p147 = scmp.ne.s32.totalorder %s142, %s144
      %p148 = scmp.eq.s32.totalorder %s18, 0
      %p149 = por %p147, %p148
      %p150 = scmp.ne.s32.totalorder %s142, %s144
      %p151 = scmp.eq.s32.totalorder %s23, 1
      %p152 = por %p150, %p151
      %p153 = scmp.ne.s32.totalorder %s144, %s145
      %p154 = scmp.eq.s32.totalorder %s23, 0
      %p155 = por %p153, %p154
      %p156 = scmp.ne.s32.totalorder %s144, %s145
      %p157 = scmp.eq.s32.totalorder %s24, 1
      %p158 = por %p156, %p157
      %p160 = scmp.ne.s32.totalorder %s145, %s159
      %p161 = scmp.eq.s32.totalorder %s24, 0
      %p162 = por %p160, %p161
      %s163 = ssub.s32 %s25, %s37
      %p164 = scmp.eq.s32.totalorder %s163, 0
      %s166 = sadd.s32 %s165, 1
      %s167 = scalar_select %p164, %s165, %s166
      %p170 = pneg %p164
      %p171 = scmp.eq.s32.totalorder %s18, 1
      %p172 = por %p170, %p171
      %p173 = scmp.ne.s32.totalorder %s165, %s168
      %p174 = scmp.eq.s32.totalorder %s18, 0
      %p175 = por %p173, %p174
      %p176 = scmp.ne.s32.totalorder %s165, %s168
      %p177 = scmp.eq.s32.totalorder %s23, 1
      %p178 = por %p176, %p177
      %p179 = scmp.ne.s32.totalorder %s168, %s169
      %p180 = scmp.eq.s32.totalorder %s23, 0
      %p181 = por %p179, %p180
      %p182 = scmp.ne.s32.totalorder %s168, %s169
      %p183 = scmp.eq.s32.totalorder %s24, 1
      %p184 = por %p182, %p183
      %p186 = scmp.ne.s32.totalorder %s169, %s185
      %p187 = scmp.eq.s32.totalorder %s24, 0
      %p188 = por %p186, %p187
      %p189 = scmp.le.s32.totalorder 1, %s18
      %p190 = scmp.lt.s32.totalorder %s18, 3
      %p191 = pnand %p189, %p190
      %p192 = pneg %p191
      // Predicated region
      $region9: #{mlp_forward.1} parent=5 // pred_check
        _
      $region10: #{mlp_forward.1} parent=5 // pred_check_branch
        %194 = sbr.rel (%p191) target = $region12
      $region11: #{mlp_forward.1} parent=5 // pred_region
        %s195 = ssub.s32 %s18, 1
        // Predicated region
        $region13: #{mlp_forward.1} parent=11 // pred_check
          %p196 = pneg %p56
        $region14: #{mlp_forward.1} parent=11 // pred_check_branch
          %198 = sbr.rel (%p196) target = $region16
        $region15: #{mlp_forward.1} parent=11 // pred_region
          %s199 = smul.u32 2, %s27
          %p200 = scmp.lt.s32.totalorder %s199, 1
          %s201 = scalar_select %p200, %s199, 1
          %s202 = smul.addr %s201, 3
          %s203 = smul.addr %s202, 4
          %s204 = scalar_lea.vmem %s0, %s203
          %s205 = smul.u32 2, %s27
        $region16: #{mlp_forward.1} parent=11 // pred_fallthru
          _
        // Predicated region
        $region17: #{mlp_forward.1} parent=11 // pred_check
          %p206 = pneg %p155
        $region18: #{mlp_forward.1} parent=11 // pred_check_branch
          %208 = sbr.rel (%p206) target = $region20
        $region19: #{mlp_forward.1} parent=11 // pred_region
          _
        $region20: #{mlp_forward.1} parent=11 // pred_fallthru
          _
      $region12: #{mlp_forward.1} parent=5 // pred_fallthru
        _
      %p209 = scmp.lt.s32.totalorder %s18, 2
      // Predicated region
      $region21: #{mlp_forward.1} parent=5 // pred_check
        %p210 = pneg %p209
      $region22: #{mlp_forward.1} parent=5 // pred_check_branch
        %212 = sbr.rel (%p210) target = $region24
      $region23: #{mlp_forward.1} parent=5 // pred_region
        // Predicated region
        $region25: #{mlp_forward.1} parent=23 // pred_check
          %p213 = pneg %p76
        $region26: #{mlp_forward.1} parent=23 // pred_check_branch
          %215 = sbr.rel (%p213) target = $region28
        $region27: #{mlp_forward.1} parent=23 // pred_region
          %s216 = sand.u32 %s66, 1
          %s217 = scalar_lea.sflag [#allocation3], %s216
          %s218 = sand.u32 %s66, 1
          %s219 = smul.addr %s218, 1152
          %s220 = scalar_lea.vmem [#allocation2], %s219
          %s221 = smul.u32 6, %s26
          %223 = vsyncadd %s217, 0
          %s224 = smul.addr %s221, 4
          %s225 = scalar_lea.hbm %s1, %s224
          %s226 = sshll.u32 %s225, 4
          %s227 = int_to_ptr.hbm [resolvable:$true] %s226
          %s228 = sshll.u32 %s220, 4
          %s229 = int_to_ptr.vmem [resolvable:$true] %s228
          %234 = dma.hbm_to_vmem [thread:$0]  %s227, 18432, %s229, %s217, 768, 384, 24
        $region28: #{mlp_forward.1} parent=23 // pred_fallthru
          _
        // Predicated region
        $region29: #{mlp_forward.1} parent=23 // pred_check
          %p235 = pneg %p102
        $region30: #{mlp_forward.1} parent=23 // pred_check_branch
          %237 = sbr.rel (%p235) target = $region32
        $region31: #{mlp_forward.1} parent=23 // pred_region
          %s238 = smul.u32 6, %s26
          %p239 = scmp.lt.s32.totalorder %s238, 11
          %s240 = scalar_select %p239, %s238, 11
          %s241 = scalar_lea.vmem %s2, %s240
          %s242 = smul.u32 6, %s26
        $region32: #{mlp_forward.1} parent=23 // pred_fallthru
          _
        // Predicated region
        $region33: #{mlp_forward.1} parent=23 // pred_check
          %p243 = pneg %p128
        $region34: #{mlp_forward.1} parent=23 // pred_check_branch
          %245 = sbr.rel (%p243) target = $region36
        $region35: #{mlp_forward.1} parent=23 // pred_region
          %s246 = sand.u32 %s118, 1
          %s247 = scalar_lea.sflag [#allocation6], %s246
          %s248 = sand.u32 %s118, 1
          %s249 = smul.addr %s248, 1152
          %s250 = scalar_lea.vmem [#allocation5], %s249
          %s251 = smul.u32 96, %s26
          %253 = vsyncadd %s247, 0
          %s254 = smul.addr %s251, 3
          %s255 = smul.addr %s254, 4
          %s256 = scalar_lea.hbm %s3, %s255
          %s257 = sshll.u32 %s256, 4
          %s258 = int_to_ptr.hbm [resolvable:$true] %s257
          %s259 = sshll.u32 %s250, 4
          %s260 = int_to_ptr.vmem [resolvable:$true] %s259
          %265 = dma.hbm_to_vmem [thread:$0]  %s258, 18432, %s260, %s247, 192, 192, 12
        $region36: #{mlp_forward.1} parent=23 // pred_fallthru
          _
      $region24: #{mlp_forward.1} parent=5 // pred_fallthru
        _
      %p266 = scmp.le.s32.totalorder 1, %s18
      %p267 = scmp.lt.s32.totalorder %s18, 3
      %p268 = pnand %p266, %p267
      %p269 = pneg %p268
      // Predicated region
      $region37: #{mlp_forward.1} parent=5 // pred_check
        _
      $region38: #{mlp_forward.1} parent=5 // pred_check_branch
        %271 = sbr.rel (%p268) target = $region40
      $region39: #{mlp_forward.1} parent=5 // pred_region
        %s272 = ssub.s32 %s18, 1
        %s273 = sand.u32 %s69, 1
        %s274 = scalar_lea.sflag [#allocation3], %s273
        %s275 = sand.u32 %s69, 1
        %s276 = smul.addr %s275, 1152
        %s277 = scalar_lea.vmem [#allocation2], %s276
        // Predicated region
        $region41: #{mlp_forward.1} parent=39 // pred_check
          %p278 = pneg %p82
        $region42: #{mlp_forward.1} parent=39 // pred_check_branch
          %280 = sbr.rel (%p278) target = $region44
        $region43: #{mlp_forward.1} parent=39 // pred_region
          %282 = dma.done %s274, 18432
        $region44: #{mlp_forward.1} parent=39 // pred_fallthru
          _
        %s283 = sand.u32 %s121, 1
        %s284 = scalar_lea.sflag [#allocation6], %s283
        %s285 = sand.u32 %s121, 1
        %s286 = smul.addr %s285, 1152
        %s287 = scalar_lea.vmem [#allocation5], %s286
        // Predicated region
        $region45: #{mlp_forward.1} parent=39 // pred_check
          %p288 = pneg %p134
        $region46: #{mlp_forward.1} parent=39 // pred_check_branch
          %290 = sbr.rel (%p288) target = $region48
        $region47: #{mlp_forward.1} parent=39 // pred_region
          %292 = dma.done %s284, 18432
        $region48: #{mlp_forward.1} parent=39 // pred_fallthru
          _
        %s293 = smul.u32 2, %s27
        %p294 = scmp.lt.s32.totalorder %s293, 1
        %s295 = scalar_select %p294, %s293, 1
        %s296 = smul.addr %s295, 3
        %s297 = smul.addr %s296, 4
        %s298 = scalar_lea.vmem %s0, %s297
        %p299 = pneg %p56
        %p300 = pneg %p53
        %s301 = sand.u32 %s69, 1
        %s302 = scalar_lea.sflag [#allocation3], %s301
        %s303 = sand.u32 %s69, 1
        %s304 = smul.addr %s303, 1152
        %s305 = scalar_lea.vmem [#allocation2], %s304
        %p306 = pneg %p82
        %p307 = pneg %p79
        %s308 = smul.u32 6, %s28
        %p309 = scmp.lt.s32.totalorder %s308, 11
        %s310 = scalar_select %p309, %s308, 11
        %s311 = scalar_lea.vmem %s2, %s310
        %p312 = pneg %p108
        %p313 = pneg %p105
        %s314 = sand.u32 %s121, 1
        %s315 = scalar_lea.sflag [#allocation6], %s314
        %s316 = sand.u32 %s121, 1
        %s317 = smul.addr %s316, 1152
        %s318 = scalar_lea.vmem [#allocation5], %s317
        %p319 = pneg %p134
        %p320 = pneg %p131
        %p321 = pneg %p155
        %p322 = pneg %p152
        %p323 = pneg %p181
        %p324 = pneg %p178
        %s325 = smul.u32 2, %s27
        %p326 = scmp.lt.s32.totalorder %s325, 1
        %s327 = scalar_select %p326, %s325, 1
        %s328 = smul.addr %s327, 3
        %s329 = smul.addr %s328, 4
        %s330 = scalar_lea.vmem %s0, %s329
        %s331 = smul.u32 2, %s27
        %s332 = smul.u32 6, %s28
        %s333 = smul.u32 6, %s28
        %p334 = scmp.lt.s32.totalorder %s333, 11
        %s335 = scalar_select %p334, %s333, 11
        %s336 = scalar_lea.vmem %s2, %s335
        %s337 = smul.u32 6, %s28
        %s338 = smul.u32 96, %s28
        %s339 = smul.u32 2, %s27
        %p340 = scmp.eq.s32.totalorder %s28, 0
        // Predicated region
        $region49: #{mlp_forward.1} parent=39 // pred_check
          %p341 = pneg %p340
        $region50: #{mlp_forward.1} parent=39 // pred_check_branch
          %343 = sbr.rel (%p341) target = $region52
        $region51: #{mlp_forward.1} parent=39 // pred_region
          %v344 = vld [vmem:[%s4] sm:$0x7]
          %v346 = vperm.slane %v344, 0
          %v347 = vperm.slane %v344, 1
          %v348 = vperm.slane %v344, 2
          %352 = vst [vmem:[#allocation7] sm:$0xff] %v346
          %353 = vst [vmem:[#allocation7 + $0x8] sm:$0xff] %v347
          %354 = vst [vmem:[#allocation7 + $0x10] sm:$0xff] %v348
          %355 = vst [vmem:[#allocation7 + $0x18] sm:$0xff] %v346
          %356 = vst [vmem:[#allocation7 + $0x20] sm:$0xff] %v347
          %357 = vst [vmem:[#allocation7 + $0x28] sm:$0xff] %v348
        $region52: #{mlp_forward.1} parent=39 // pred_fallthru
          _
        %v358 = vld [vmem:[%s330] sm:$0xff]
        %v359 = vld [vmem:[%s330 + $0x8] sm:$0xf]
        %v360 = vld [vmem:[%s330 + $0xc] sm:$0xff]
        %v361 = vld [vmem:[%s330 + $0x14] sm:$0xf]
        %v362 = vld [vmem:[%s277] sm:$0xff]
        %v363 = vld [vmem:[%s277 + $0x18] sm:$0xff]
        %v364 = vld [vmem:[%s277 + $0x30] sm:$0xff]
        %v365 = vld [vmem:[%s277 + $0x48] sm:$0xff]
        %v366 = vld [vmem:[%s277 + $0x60] sm:$0xff]
        %v367 = vld [vmem:[%s277 + $0x78] sm:$0xff]
        %v368 = vld [vmem:[%s277 + $0x90] sm:$0xff]
        %v369 = vld [vmem:[%s277 + $0xa8] sm:$0xff]
        %v370 = vld [vmem:[%s277 + $0xc0] sm:$0xff]
        %v371 = vld [vmem:[%s277 + $0xd8] sm:$0xff]
        %v372 = vld [vmem:[%s277 + $0xf0] sm:$0xff]
        %v373 = vld [vmem:[%s277 + $0x108] sm:$0xff]
        %v374 = vld [vmem:[%s277 + $0x120] sm:$0xff]
        %v375 = vld [vmem:[%s277 + $0x138] sm:$0xff]
        %v376 = vld [vmem:[%s277 + $0x150] sm:$0xff]
        %v377 = vld [vmem:[%s277 + $0x168] sm:$0xff]
        %v378 = vld [vmem:[%s277 + $0x180] sm:$0xff]
        %v379 = vld [vmem:[%s277 + $0x198] sm:$0xff]
        %v380 = vld [vmem:[%s277 + $0x1b0] sm:$0xff]
        %v381 = vld [vmem:[%s277 + $0x1c8] sm:$0xff]
        %v382 = vld [vmem:[%s277 + $0x1e0] sm:$0xff]
        %v383 = vld [vmem:[%s277 + $0x1f8] sm:$0xff]
        %v384 = vld [vmem:[%s277 + $0x210] sm:$0xff]
        %v385 = vld [vmem:[%s277 + $0x228] sm:$0xff]
        %v386 = vld [vmem:[%s277 + $0x240] sm:$0xff]
        %v387 = vld [vmem:[%s277 + $0x258] sm:$0xff]
        %v388 = vld [vmem:[%s277 + $0x270] sm:$0xff]
        %v389 = vld [vmem:[%s277 + $0x288] sm:$0xff]
        %v390 = vld [vmem:[%s277 + $0x2a0] sm:$0xff]
        %v391 = vld [vmem:[%s277 + $0x2b8] sm:$0xff]
        %v392 = vld [vmem:[%s277 + $0x2d0] sm:$0xff]
        %v393 = vld [vmem:[%s277 + $0x2e8] sm:$0xff]
        %v394 = vld [vmem:[%s277 + $0x300] sm:$0xff]
        %v395 = vld [vmem:[%s277 + $0x318] sm:$0xff]
        %v396 = vld [vmem:[%s277 + $0x330] sm:$0xff]
        %v397 = vld [vmem:[%s277 + $0x348] sm:$0xff]
        %v398 = vld [vmem:[%s277 + $0x360] sm:$0xff]
        %v399 = vld [vmem:[%s277 + $0x378] sm:$0xff]
        %v400 = vld [vmem:[%s277 + $0x390] sm:$0xff]
        %v401 = vld [vmem:[%s277 + $0x3a8] sm:$0xff]
        %v402 = vld [vmem:[%s277 + $0x3c0] sm:$0xff]
        %v403 = vld [vmem:[%s277 + $0x3d8] sm:$0xff]
        %v404 = vld [vmem:[%s277 + $0x3f0] sm:$0xff]
        %v405 = vld [vmem:[%s277 + $0x408] sm:$0xff]
        %v406 = vld [vmem:[%s277 + $0x420] sm:$0xff]
        %v407 = vld [vmem:[%s277 + $0x438] sm:$0xff]
        %v408 = vld [vmem:[%s277 + $0x450] sm:$0xff]
        %v409 = vld [vmem:[%s277 + $0x468] sm:$0xff]
        %v410 = vld [vmem:[%s336] sm:$0x3]
        %v412 = vperm.slane %v410, 0
        %v413 = vperm.slane %v410, 1
        %v420 = vunpack.c.l.b16 %v358
        %v421 = vunpack.c.h.b16 %v358
        %v422 = vunpack.c.l.b16 %v359
        %v423 = vunpack.c.l.b16 %v360
        %v424 = vunpack.c.h.b16 %v360
        %v425 = vunpack.c.l.b16 %v361
        %v426 = vpack.c.b16 %v423, %v420
        %v427 = vpack.c.b16 %v424, %v421
        %v428 = vpack.c.b16 %v425, %v422
        %v480 = vunpack.c.l.b16 %v362
        %v481 = vunpack.c.h.b16 %v362
        %v482 = vunpack.c.l.b16 %v363
        %v483 = vunpack.c.h.b16 %v363
        %v484 = vunpack.c.l.b16 %v364
        %v485 = vunpack.c.h.b16 %v364
        %v486 = vunpack.c.l.b16 %v365
        %v487 = vunpack.c.h.b16 %v365
        %v488 = vunpack.c.l.b16 %v366
        %v489 = vunpack.c.h.b16 %v366
        %v490 = vunpack.c.l.b16 %v367
        %v491 = vunpack.c.h.b16 %v367
        %v492 = vunpack.c.l.b16 %v368
        %v493 = vunpack.c.h.b16 %v368
        %v494 = vunpack.c.l.b16 %v369
        %v495 = vunpack.c.h.b16 %v369
        %v496 = vunpack.c.l.b16 %v370
        %v497 = vunpack.c.h.b16 %v370
        %v498 = vunpack.c.l.b16 %v371
        %v499 = vunpack.c.h.b16 %v371
        %v500 = vunpack.c.l.b16 %v372
        %v501 = vunpack.c.h.b16 %v372
        %v502 = vunpack.c.l.b16 %v373
        %v503 = vunpack.c.h.b16 %v373
        %v504 = vunpack.c.l.b16 %v374
        %v505 = vunpack.c.h.b16 %v374
        %v506 = vunpack.c.l.b16 %v375
        %v507 = vunpack.c.h.b16 %v375
        %v508 = vunpack.c.l.b16 %v376
        %v509 = vunpack.c.h.b16 %v376
        %v510 = vunpack.c.l.b16 %v377
        %v511 = vunpack.c.h.b16 %v377
        %v512 = vunpack.c.l.b16 %v378
        %v513 = vunpack.c.h.b16 %v378
        %v514 = vunpack.c.l.b16 %v379
        %v515 = vunpack.c.h.b16 %v379
        %v516 = vunpack.c.l.b16 %v380
        %v517 = vunpack.c.h.b16 %v380
        %v518 = vunpack.c.l.b16 %v381
        %v519 = vunpack.c.h.b16 %v381
        %v520 = vunpack.c.l.b16 %v382
        %v521 = vunpack.c.h.b16 %v382
        %v522 = vunpack.c.l.b16 %v383
        %v523 = vunpack.c.h.b16 %v383
        %v524 = vunpack.c.l.b16 %v384
        %v525 = vunpack.c.h.b16 %v384
        %v526 = vunpack.c.l.b16 %v385
        %v527 = vunpack.c.h.b16 %v385
        %v528 = vunpack.c.l.b16 %v386
        %v529 = vunpack.c.h.b16 %v386
        %v530 = vunpack.c.l.b16 %v387
        %v531 = vunpack.c.h.b16 %v387
        %v532 = vunpack.c.l.b16 %v388
        %v533 = vunpack.c.h.b16 %v388
        %v534 = vunpack.c.l.b16 %v389
        %v535 = vunpack.c.h.b16 %v389
        %v536 = vunpack.c.l.b16 %v390
        %v537 = vunpack.c.h.b16 %v390
        %v538 = vunpack.c.l.b16 %v391
        %v539 = vunpack.c.h.b16 %v391
        %v540 = vunpack.c.l.b16 %v392
        %v541 = vunpack.c.h.b16 %v392
        %v542 = vunpack.c.l.b16 %v393
        %v543 = vunpack.c.h.b16 %v393
        %v544 = vunpack.c.l.b16 %v394
        %v545 = vunpack.c.h.b16 %v394
        %v546 = vunpack.c.l.b16 %v395
        %v547 = vunpack.c.h.b16 %v395
        %v548 = vunpack.c.l.b16 %v396
        %v549 = vunpack.c.h.b16 %v396
        %v550 = vunpack.c.l.b16 %v397
        %v551 = vunpack.c.h.b16 %v397
        %v552 = vunpack.c.l.b16 %v398
        %v553 = vunpack.c.h.b16 %v398
        %v554 = vunpack.c.l.b16 %v399
        %v555 = vunpack.c.h.b16 %v399
        %v556 = vunpack.c.l.b16 %v400
        %v557 = vunpack.c.h.b16 %v400
        %v558 = vunpack.c.l.b16 %v401
        %v559 = vunpack.c.h.b16 %v401
        %v560 = vunpack.c.l.b16 %v402
        %v561 = vunpack.c.h.b16 %v402
        %v562 = vunpack.c.l.b16 %v403
        %v563 = vunpack.c.h.b16 %v403
        %v564 = vunpack.c.l.b16 %v404
        %v565 = vunpack.c.h.b16 %v404
        %v566 = vunpack.c.l.b16 %v405
        %v567 = vunpack.c.h.b16 %v405
        %v568 = vunpack.c.l.b16 %v406
        %v569 = vunpack.c.h.b16 %v406
        %v570 = vunpack.c.l.b16 %v407
        %v571 = vunpack.c.h.b16 %v407
        %v572 = vunpack.c.l.b16 %v408
        %v573 = vunpack.c.h.b16 %v408
        %v574 = vunpack.c.l.b16 %v409
        %v575 = vunpack.c.h.b16 %v409
        %v576 = vpack.c.b16 %v482, %v480
        %v577 = vpack.c.b16 %v483, %v481
        %v578 = vpack.c.b16 %v486, %v484
        %v579 = vpack.c.b16 %v487, %v485
        %v580 = vpack.c.b16 %v490, %v488
        %v581 = vpack.c.b16 %v491, %v489
        %v582 = vpack.c.b16 %v494, %v492
        %v583 = vpack.c.b16 %v495, %v493
        %v584 = vpack.c.b16 %v498, %v496
        %v585 = vpack.c.b16 %v499, %v497
        %v586 = vpack.c.b16 %v502, %v500
        %v587 = vpack.c.b16 %v503, %v501
        %v588 = vpack.c.b16 %v506, %v504
        %v589 = vpack.c.b16 %v507, %v505
        %v590 = vpack.c.b16 %v510, %v508
        %v591 = vpack.c.b16 %v511, %v509
        %v592 = vpack.c.b16 %v514, %v512
        %v593 = vpack.c.b16 %v515, %v513
        %v594 = vpack.c.b16 %v518, %v516
        %v595 = vpack.c.b16 %v519, %v517
        %v596 = vpack.c.b16 %v522, %v520
        %v597 = vpack.c.b16 %v523, %v521
        %v598 = vpack.c.b16 %v526, %v524
        %v599 = vpack.c.b16 %v527, %v525
        %v600 = vpack.c.b16 %v530, %v528
        %v601 = vpack.c.b16 %v531, %v529
        %v602 = vpack.c.b16 %v534, %v532
        %v603 = vpack.c.b16 %v535, %v533
        %v604 = vpack.c.b16 %v538, %v536
        %v605 = vpack.c.b16 %v539, %v537
        %v606 = vpack.c.b16 %v542, %v540
        %v607 = vpack.c.b16 %v543, %v541
        %v608 = vpack.c.b16 %v546, %v544
        %v609 = vpack.c.b16 %v547, %v545
        %v610 = vpack.c.b16 %v550, %v548
        %v611 = vpack.c.b16 %v551, %v549
        %v612 = vpack.c.b16 %v554, %v552
        %v613 = vpack.c.b16 %v555, %v553
        %v614 = vpack.c.b16 %v558, %v556
        %v615 = vpack.c.b16 %v559, %v557
        %v616 = vpack.c.b16 %v562, %v560
        %v617 = vpack.c.b16 %v563, %v561
        %v618 = vpack.c.b16 %v566, %v564
        %v619 = vpack.c.b16 %v567, %v565
        %v620 = vpack.c.b16 %v570, %v568
        %v621 = vpack.c.b16 %v571, %v569
        %v622 = vpack.c.b16 %v574, %v572
        %v623 = vpack.c.b16 %v575, %v573
        %672 = vmatpush.bf16.msra.mxu0 %v590
        %673 = vmatpush.bf16.msra.mxu0 %v588
        %674 = vmatpush.bf16.msra.mxu0 %v586
        %675 = vmatpush.bf16.msra.mxu0 %v584
        %676 = vmatpush.bf16.msra.mxu0 %v582
        %677 = vmatpush.bf16.msra.mxu0 %v580
        %678 = vmatpush.bf16.msra.mxu0 %v578
        %679 = vmatpush.bf16.msra.mxu0 %v576
        %680 = vmatmul.bf16.gmra.mxu0 %v426
        %v681 = vpop.f32.mrf.mxu0
        %v682 = vadd.f32 %v412, %v681
        %v683 = vpop.f32.mrf.mxu0
        %v684 = vadd.f32 %v412, %v683
        %685 = vdwg.mxu0
        %686 = vmatpush.bf16.msra.mxu0 %v606
        %687 = vmatpush.bf16.msra.mxu0 %v604
        %688 = vmatpush.bf16.msra.mxu0 %v602
        %689 = vmatpush.bf16.msra.mxu0 %v600
        %690 = vmatpush.bf16.msra.mxu0 %v598
        %691 = vmatpush.bf16.msra.mxu0 %v596
        %692 = vmatpush.bf16.msra.mxu0 %v594
        %693 = vmatpush.bf16.msra.mxu0 %v592
        %694 = vmatmul.bf16.gmra.mxu0 %v427
        %v695 = vpop.f32.mrf.mxu0
        %v696 = vadd.f32 %v682, %v695
        %v697 = vpop.f32.mrf.mxu0
        %v698 = vadd.f32 %v684, %v697
        %699 = vdwg.mxu0
        %700 = vmatpush.bf16.msra.mxu0 %v622
        %701 = vmatpush.bf16.msra.mxu0 %v620
        %702 = vmatpush.bf16.msra.mxu0 %v618
        %703 = vmatpush.bf16.msra.mxu0 %v616
        %704 = vmatpush.bf16.msra.mxu0 %v614
        %705 = vmatpush.bf16.msra.mxu0 %v612
        %706 = vmatpush.bf16.msra.mxu0 %v610
        %707 = vmatpush.bf16.msra.mxu0 %v608
        %708 = vmatmul.bf16.gmra.mxu0 %v428
        %v709 = vpop.f32.mrf.mxu0
        %v710 = vadd.f32 %v696, %v709
        %v711 = vpop.f32.mrf.mxu0
        %v712 = vadd.f32 %v698, %v711
        %713 = vdwg.mxu0
        %714 = vmatpush.bf16.msra.mxu0 %v591
        %715 = vmatpush.bf16.msra.mxu0 %v589
        %716 = vmatpush.bf16.msra.mxu0 %v587
        %717 = vmatpush.bf16.msra.mxu0 %v585
        %718 = vmatpush.bf16.msra.mxu0 %v583
        %719 = vmatpush.bf16.msra.mxu0 %v581
        %720 = vmatpush.bf16.msra.mxu0 %v579
        %721 = vmatpush.bf16.msra.mxu0 %v577
        %722 = vmatmul.bf16.gmra.mxu0 %v426
        %v723 = vpop.f32.mrf.mxu0
        %v724 = vadd.f32 %v413, %v723
        %v725 = vpop.f32.mrf.mxu0
        %v726 = vadd.f32 %v413, %v725
        %727 = vdwg.mxu0
        %728 = vmatpush.bf16.msra.mxu0 %v607
        %729 = vmatpush.bf16.msra.mxu0 %v605
        %730 = vmatpush.bf16.msra.mxu0 %v603
        %731 = vmatpush.bf16.msra.mxu0 %v601
        %732 = vmatpush.bf16.msra.mxu0 %v599
        %733 = vmatpush.bf16.msra.mxu0 %v597
        %734 = vmatpush.bf16.msra.mxu0 %v595
        %735 = vmatpush.bf16.msra.mxu0 %v593
        %736 = vmatmul.bf16.gmra.mxu0 %v427
        %v737 = vpop.f32.mrf.mxu0
        %v738 = vadd.f32 %v724, %v737
        %v739 = vpop.f32.mrf.mxu0
        %v740 = vadd.f32 %v726, %v739
        %741 = vdwg.mxu0
        %742 = vmatpush.bf16.msra.mxu0 %v623
        %743 = vmatpush.bf16.msra.mxu0 %v621
        %744 = vmatpush.bf16.msra.mxu0 %v619
        %745 = vmatpush.bf16.msra.mxu0 %v617
        %746 = vmatpush.bf16.msra.mxu0 %v615
        %747 = vmatpush.bf16.msra.mxu0 %v613
        %748 = vmatpush.bf16.msra.mxu0 %v611
        %749 = vmatpush.bf16.msra.mxu0 %v609
        %750 = vmatmul.bf16.gmra.mxu0 %v428
        %v751 = vpop.f32.mrf.mxu0
        %v752 = vadd.f32 %v738, %v751
        %v753 = vpop.f32.mrf.mxu0
        %v754 = vadd.f32 %v740, %v753
        %755 = vdwg.mxu0
        %v756 = vmul.f32 %v710, %v710
        %v757 = vmul.f32 %v752, %v752
        %v758 = vmul.f32 %v712, %v712
        %v759 = vmul.f32 %v754, %v754
        %v760 = vmul.f32 %v710, 0.5
        %v761 = vmul.f32 %v752, 0.5
        %v762 = vmul.f32 %v712, 0.5
        %v763 = vmul.f32 %v754, 0.5
        %v764 = vmul.f32 %v710, 0.7978846
        %v765 = vmul.f32 %v752, 0.7978846
        %v766 = vmul.f32 %v712, 0.7978846
        %v767 = vmul.f32 %v754, 0.7978846
        %v768 = vmul.f32 %v756, 0.044715
        %v769 = vmul.f32 %v757, 0.044715
        %v770 = vmul.f32 %v758, 0.044715
        %v771 = vmul.f32 %v759, 0.044715
        %v772 = vadd.f32 %v768, 1.0
        %v773 = vadd.f32 %v769, 1.0
        %v774 = vadd.f32 %v770, 1.0
        %v775 = vadd.f32 %v771, 1.0
        %v776 = vmul.f32 %v764, %v772
        %v777 = vmul.f32 %v765, %v773
        %v778 = vmul.f32 %v766, %v774
        %v779 = vmul.f32 %v767, %v775
        %v780 = vtanh.pop %v776
        %v781 = vtanh.pop %v777
        %v782 = vtanh.pop %v778
        %v783 = vtanh.pop %v779
        %v784 = vadd.f32 %v780, 1.0
        %v785 = vadd.f32 %v781, 1.0
        %v786 = vadd.f32 %v782, 1.0
        %v787 = vadd.f32 %v783, 1.0
        %v788 = vmul.f32 %v760, %v784
        %v789 = vmul.f32 %v761, %v785
        %v790 = vmul.f32 %v762, %v786
        %v791 = vmul.f32 %v763, %v787
        %v792 = vpack.c.bf16 %v790, %v788
        %v793 = vpack.c.bf16 %v791, %v789
        %v794 = vld [vmem:[%s287] sm:$0xff]
        %v795 = vld [vmem:[%s287 + $0x8] sm:$0xf]
        %v796 = vld [vmem:[%s287 + $0xc] sm:$0xff]
        %v797 = vld [vmem:[%s287 + $0x14] sm:$0xf]
        %v798 = vld [vmem:[%s287 + $0x18] sm:$0xff]
        %v799 = vld [vmem:[%s287 + $0x20] sm:$0xf]
        %v800 = vld [vmem:[%s287 + $0x24] sm:$0xff]
        %v801 = vld [vmem:[%s287 + $0x2c] sm:$0xf]
        %v802 = vld [vmem:[%s287 + $0x30] sm:$0xff]
        %v803 = vld [vmem:[%s287 + $0x38] sm:$0xf]
        %v804 = vld [vmem:[%s287 + $0x3c] sm:$0xff]
        %v805 = vld [vmem:[%s287 + $0x44] sm:$0xf]
        %v806 = vld [vmem:[%s287 + $0x48] sm:$0xff]
        %v807 = vld [vmem:[%s287 + $0x50] sm:$0xf]
        %v808 = vld [vmem:[%s287 + $0x54] sm:$0xff]
        %v809 = vld [vmem:[%s287 + $0x5c] sm:$0xf]
        %v810 = vld [vmem:[%s287 + $0x60] sm:$0xff]
        %v811 = vld [vmem:[%s287 + $0x68] sm:$0xf]
        %v812 = vld [vmem:[%s287 + $0x6c] sm:$0xff]
        %v813 = vld [vmem:[%s287 + $0x74] sm:$0xf]
        %v814 = vld [vmem:[%s287 + $0x78] sm:$0xff]
        %v815 = vld [vmem:[%s287 + $0x80] sm:$0xf]
        %v816 = vld [vmem:[%s287 + $0x84] sm:$0xff]
        %v817 = vld [vmem:[%s287 + $0x8c] sm:$0xf]
        %v818 = vld [vmem:[%s287 + $0x90] sm:$0xff]
        %v819 = vld [vmem:[%s287 + $0x98] sm:$0xf]
        %v820 = vld [vmem:[%s287 + $0x9c] sm:$0xff]
        %v821 = vld [vmem:[%s287 + $0xa4] sm:$0xf]
        %v822 = vld [vmem:[%s287 + $0xa8] sm:$0xff]
        %v823 = vld [vmem:[%s287 + $0xb0] sm:$0xf]
        %v824 = vld [vmem:[%s287 + $0xb4] sm:$0xff]
        %v825 = vld [vmem:[%s287 + $0xbc] sm:$0xf]
        %v826 = vld [vmem:[%s287 + $0xc0] sm:$0xff]
        %v827 = vld [vmem:[%s287 + $0xc8] sm:$0xf]
        %v828 = vld [vmem:[%s287 + $0xcc] sm:$0xff]
        %v829 = vld [vmem:[%s287 + $0xd4] sm:$0xf]
        %v830 = vld [vmem:[%s287 + $0xd8] sm:$0xff]
        %v831 = vld [vmem:[%s287 + $0xe0] sm:$0xf]
        %v832 = vld [vmem:[%s287 + $0xe4] sm:$0xff]
        %v833 = vld [vmem:[%s287 + $0xec] sm:$0xf]
        %v834 = vld [vmem:[%s287 + $0xf0] sm:$0xff]
        %v835 = vld [vmem:[%s287 + $0xf8] sm:$0xf]
        %v836 = vld [vmem:[%s287 + $0xfc] sm:$0xff]
        %v837 = vld [vmem:[%s287 + $0x104] sm:$0xf]
        %v838 = vld [vmem:[%s287 + $0x108] sm:$0xff]
        %v839 = vld [vmem:[%s287 + $0x110] sm:$0xf]
        %v840 = vld [vmem:[%s287 + $0x114] sm:$0xff]
        %v841 = vld [vmem:[%s287 + $0x11c] sm:$0xf]
        %v842 = vld [vmem:[%s287 + $0x120] sm:$0xff]
        %v843 = vld [vmem:[%s287 + $0x128] sm:$0xf]
        %v844 = vld [vmem:[%s287 + $0x12c] sm:$0xff]
        %v845 = vld [vmem:[%s287 + $0x134] sm:$0xf]
        %v846 = vld [vmem:[%s287 + $0x138] sm:$0xff]
        %v847 = vld [vmem:[%s287 + $0x140] sm:$0xf]
        %v848 = vld [vmem:[%s287 + $0x144] sm:$0xff]
        %v849 = vld [vmem:[%s287 + $0x14c] sm:$0xf]
        %v850 = vld [vmem:[%s287 + $0x150] sm:$0xff]
        %v851 = vld [vmem:[%s287 + $0x158] sm:$0xf]
        %v852 = vld [vmem:[%s287 + $0x15c] sm:$0xff]
        %v853 = vld [vmem:[%s287 + $0x164] sm:$0xf]
        %v854 = vld [vmem:[%s287 + $0x168] sm:$0xff]
        %v855 = vld [vmem:[%s287 + $0x170] sm:$0xf]
        %v856 = vld [vmem:[%s287 + $0x174] sm:$0xff]
        %v857 = vld [vmem:[%s287 + $0x17c] sm:$0xf]
        %v858 = vld [vmem:[%s277 + $0x8] sm:$0xff]
        %v859 = vld [vmem:[%s277 + $0x20] sm:$0xff]
        %v860 = vld [vmem:[%s277 + $0x38] sm:$0xff]
        %v861 = vld [vmem:[%s277 + $0x50] sm:$0xff]
        %v862 = vld [vmem:[%s277 + $0x68] sm:$0xff]
        %v863 = vld [vmem:[%s277 + $0x80] sm:$0xff]
        %v864 = vld [vmem:[%s277 + $0x98] sm:$0xff]
        %v865 = vld [vmem:[%s277 + $0xb0] sm:$0xff]
        %v866 = vld [vmem:[%s277 + $0xc8] sm:$0xff]
        %v867 = vld [vmem:[%s277 + $0xe0] sm:$0xff]
        %v868 = vld [vmem:[%s277 + $0xf8] sm:$0xff]
        %v869 = vld [vmem:[%s277 + $0x110] sm:$0xff]
        %v870 = vld [vmem:[%s277 + $0x128] sm:$0xff]
        %v871 = vld [vmem:[%s277 + $0x140] sm:$0xff]
        %v872 = vld [vmem:[%s277 + $0x158] sm:$0xff]
        %v873 = vld [vmem:[%s277 + $0x170] sm:$0xff]
        %v874 = vld [vmem:[%s277 + $0x188] sm:$0xff]
        %v875 = vld [vmem:[%s277 + $0x1a0] sm:$0xff]
        %v876 = vld [vmem:[%s277 + $0x1b8] sm:$0xff]
        %v877 = vld [vmem:[%s277 + $0x1d0] sm:$0xff]
        %v878 = vld [vmem:[%s277 + $0x1e8] sm:$0xff]
        %v879 = vld [vmem:[%s277 + $0x200] sm:$0xff]
        %v880 = vld [vmem:[%s277 + $0x218] sm:$0xff]
        %v881 = vld [vmem:[%s277 + $0x230] sm:$0xff]
        %v882 = vld [vmem:[%s277 + $0x248] sm:$0xff]
        %v883 = vld [vmem:[%s277 + $0x260] sm:$0xff]
        %v884 = vld [vmem:[%s277 + $0x278] sm:$0xff]
        %v885 = vld [vmem:[%s277 + $0x290] sm:$0xff]
        %v886 = vld [vmem:[%s277 + $0x2a8] sm:$0xff]
        %v887 = vld [vmem:[%s277 + $0x2c0] sm:$0xff]
        %v888 = vld [vmem:[%s277 + $0x2d8] sm:$0xff]
        %v889 = vld [vmem:[%s277 + $0x2f0] sm:$0xff]
        %v890 = vld [vmem:[%s277 + $0x308] sm:$0xff]
        %v891 = vld [vmem:[%s277 + $0x320] sm:$0xff]
        %v892 = vld [vmem:[%s277 + $0x338] sm:$0xff]
        %v893 = vld [vmem:[%s277 + $0x350] sm:$0xff]
        %v894 = vld [vmem:[%s277 + $0x368] sm:$0xff]
        %v895 = vld [vmem:[%s277 + $0x380] sm:$0xff]
        %v896 = vld [vmem:[%s277 + $0x398] sm:$0xff]
        %v897 = vld [vmem:[%s277 + $0x3b0] sm:$0xff]
        %v898 = vld [vmem:[%s277 + $0x3c8] sm:$0xff]
        %v899 = vld [vmem:[%s277 + $0x3e0] sm:$0xff]
        %v900 = vld [vmem:[%s277 + $0x3f8] sm:$0xff]
        %v901 = vld [vmem:[%s277 + $0x410] sm:$0xff]
        %v902 = vld [vmem:[%s277 + $0x428] sm:$0xff]
        %v903 = vld [vmem:[%s277 + $0x440] sm:$0xff]
        %v904 = vld [vmem:[%s277 + $0x458] sm:$0xff]
        %v905 = vld [vmem:[%s277 + $0x470] sm:$0xff]
        %v906 = vld [vmem:[%s336 + $0x2] sm:$0x3]
        %v908 = vperm.slane %v906, 0
        %v909 = vperm.slane %v906, 1
        %v960 = vunpack.c.l.b16 %v858
        %v961 = vunpack.c.h.b16 %v858
        %v962 = vunpack.c.l.b16 %v859
        %v963 = vunpack.c.h.b16 %v859
        %v964 = vunpack.c.l.b16 %v860
        %v965 = vunpack.c.h.b16 %v860
        %v966 = vunpack.c.l.b16 %v861
        %v967 = vunpack.c.h.b16 %v861
        %v968 = vunpack.c.l.b16 %v862
        %v969 = vunpack.c.h.b16 %v862
        %v970 = vunpack.c.l.b16 %v863
        %v971 = vunpack.c.h.b16 %v863
        %v972 = vunpack.c.l.b16 %v864
        %v973 = vunpack.c.h.b16 %v864
        %v974 = vunpack.c.l.b16 %v865
        %v975 = vunpack.c.h.b16 %v865
        %v976 = vunpack.c.l.b16 %v866
        %v977 = vunpack.c.h.b16 %v866
        %v978 = vunpack.c.l.b16 %v867
        %v979 = vunpack.c.h.b16 %v867
        %v980 = vunpack.c.l.b16 %v868
        %v981 = vunpack.c.h.b16 %v868
        %v982 = vunpack.c.l.b16 %v869
        %v983 = vunpack.c.h.b16 %v869
        %v984 = vunpack.c.l.b16 %v870
        %v985 = vunpack.c.h.b16 %v870
        %v986 = vunpack.c.l.b16 %v871
        %v987 = vunpack.c.h.b16 %v871
        %v988 = vunpack.c.l.b16 %v872
        %v989 = vunpack.c.h.b16 %v872
        %v990 = vunpack.c.l.b16 %v873
        %v991 = vunpack.c.h.b16 %v873
        %v992 = vunpack.c.l.b16 %v874
        %v993 = vunpack.c.h.b16 %v874
        %v994 = vunpack.c.l.b16 %v875
        %v995 = vunpack.c.h.b16 %v875
        %v996 = vunpack.c.l.b16 %v876
        %v997 = vunpack.c.h.b16 %v876
        %v998 = vunpack.c.l.b16 %v877
        %v999 = vunpack.c.h.b16 %v877
        %v1000 = vunpack.c.l.b16 %v878
        %v1001 = vunpack.c.h.b16 %v878
        %v1002 = vunpack.c.l.b16 %v879
        %v1003 = vunpack.c.h.b16 %v879
        %v1004 = vunpack.c.l.b16 %v880
        %v1005 = vunpack.c.h.b16 %v880
        %v1006 = vunpack.c.l.b16 %v881
        %v1007 = vunpack.c.h.b16 %v881
        %v1008 = vunpack.c.l.b16 %v882
        %v1009 = vunpack.c.h.b16 %v882
        %v1010 = vunpack.c.l.b16 %v883
        %v1011 = vunpack.c.h.b16 %v883
        %v1012 = vunpack.c.l.b16 %v884
        %v1013 = vunpack.c.h.b16 %v884
        %v1014 = vunpack.c.l.b16 %v885
        %v1015 = vunpack.c.h.b16 %v885
        %v1016 = vunpack.c.l.b16 %v886
        %v1017 = vunpack.c.h.b16 %v886
        %v1018 = vunpack.c.l.b16 %v887
        %v1019 = vunpack.c.h.b16 %v887
        %v1020 = vunpack.c.l.b16 %v888
        %v1021 = vunpack.c.h.b16 %v888
        %v1022 = vunpack.c.l.b16 %v889
        %v1023 = vunpack.c.h.b16 %v889
        %v1024 = vunpack.c.l.b16 %v890
        %v1025 = vunpack.c.h.b16 %v890
        %v1026 = vunpack.c.l.b16 %v891
        %v1027 = vunpack.c.h.b16 %v891
        %v1028 = vunpack.c.l.b16 %v892
        %v1029 = vunpack.c.h.b16 %v892
        %v1030 = vunpack.c.l.b16 %v893
        %v1031 = vunpack.c.h.b16 %v893
        %v1032 = vunpack.c.l.b16 %v894
        %v1033 = vunpack.c.h.b16 %v894
        %v1034 = vunpack.c.l.b16 %v895
        %v1035 = vunpack.c.h.b16 %v895
        %v1036 = vunpack.c.l.b16 %v896
        %v1037 = vunpack.c.h.b16 %v896
        %v1038 = vunpack.c.l.b16 %v897
        %v1039 = vunpack.c.h.b16 %v897
        %v1040 = vunpack.c.l.b16 %v898
        %v1041 = vunpack.c.h.b16 %v898
        %v1042 = vunpack.c.l.b16 %v899
        %v1043 = vunpack.c.h.b16 %v899
        %v1044 = vunpack.c.l.b16 %v900
        %v1045 = vunpack.c.h.b16 %v900
        %v1046 = vunpack.c.l.b16 %v901
        %v1047 = vunpack.c.h.b16 %v901
        %v1048 = vunpack.c.l.b16 %v902
        %v1049 = vunpack.c.h.b16 %v902
        %v1050 = vunpack.c.l.b16 %v903
        %v1051 = vunpack.c.h.b16 %v903
        %v1052 = vunpack.c.l.b16 %v904
        %v1053 = vunpack.c.h.b16 %v904
        %v1054 = vunpack.c.l.b16 %v905
        %v1055 = vunpack.c.h.b16 %v905
        %v1056 = vpack.c.b16 %v962, %v960
        %v1057 = vpack.c.b16 %v963, %v961
        %v1058 = vpack.c.b16 %v966, %v964
        %v1059 = vpack.c.b16 %v967, %v965
        %v1060 = vpack.c.b16 %v970, %v968
        %v1061 = vpack.c.b16 %v971, %v969
        %v1062 = vpack.c.b16 %v974, %v972
        %v1063 = vpack.c.b16 %v975, %v973
        %v1064 = vpack.c.b16 %v978, %v976
        %v1065 = vpack.c.b16 %v979, %v977
        %v1066 = vpack.c.b16 %v982, %v980
        %v1067 = vpack.c.b16 %v983, %v981
        %v1068 = vpack.c.b16 %v986, %v984
        %v1069 = vpack.c.b16 %v987, %v985
        %v1070 = vpack.c.b16 %v990, %v988
        %v1071 = vpack.c.b16 %v991, %v989
        %v1072 = vpack.c.b16 %v994, %v992
        %v1073 = vpack.c.b16 %v995, %v993
        %v1074 = vpack.c.b16 %v998, %v996
        %v1075 = vpack.c.b16 %v999, %v997
        %v1076 = vpack.c.b16 %v1002, %v1000
        %v1077 = vpack.c.b16 %v1003, %v1001
        %v1078 = vpack.c.b16 %v1006, %v1004
        %v1079 = vpack.c.b16 %v1007, %v1005
        %v1080 = vpack.c.b16 %v1010, %v1008
        %v1081 = vpack.c.b16 %v1011, %v1009
        %v1082 = vpack.c.b16 %v1014, %v1012
        %v1083 = vpack.c.b16 %v1015, %v1013
        %v1084 = vpack.c.b16 %v1018, %v1016
        %v1085 = vpack.c.b16 %v1019, %v1017
        %v1086 = vpack.c.b16 %v1022, %v1020
        %v1087 = vpack.c.b16 %v1023, %v1021
        %v1088 = vpack.c.b16 %v1026, %v1024
        %v1089 = vpack.c.b16 %v1027, %v1025
        %v1090 = vpack.c.b16 %v1030, %v1028
        %v1091 = vpack.c.b16 %v1031, %v1029
        %v1092 = vpack.c.b16 %v1034, %v1032
        %v1093 = vpack.c.b16 %v1035, %v1033
        %v1094 = vpack.c.b16 %v1038, %v1036
        %v1095 = vpack.c.b16 %v1039, %v1037
        %v1096 = vpack.c.b16 %v1042, %v1040
        %v1097 = vpack.c.b16 %v1043, %v1041
        %v1098 = vpack.c.b16 %v1046, %v1044
        %v1099 = vpack.c.b16 %v1047, %v1045
        %v1100 = vpack.c.b16 %v1050, %v1048
        %v1101 = vpack.c.b16 %v1051, %v1049
        %v1102 = vpack.c.b16 %v1054, %v1052
        %v1103 = vpack.c.b16 %v1055, %v1053
        %1152 = vmatpush.bf16.msra.mxu0 %v1070
        %1153 = vmatpush.bf16.msra.mxu0 %v1068
        %1154 = vmatpush.bf16.msra.mxu0 %v1066
        %1155 = vmatpush.bf16.msra.mxu0 %v1064
        %1156 = vmatpush.bf16.msra.mxu0 %v1062
        %1157 = vmatpush.bf16.msra.mxu0 %v1060
        %1158 = vmatpush.bf16.msra.mxu0 %v1058
        %1159 = vmatpush.bf16.msra.mxu0 %v1056
        %1160 = vmatmul.bf16.gmra.mxu0 %v426
        %v1161 = vpop.f32.mrf.mxu0
        %v1162 = vadd.f32 %v908, %v1161
        %v1163 = vpop.f32.mrf.mxu0
        %v1164 = vadd.f32 %v908, %v1163
        %1165 = vdwg.mxu0
        %1166 = vmatpush.bf16.msra.mxu0 %v1086
        %1167 = vmatpush.bf16.msra.mxu0 %v1084
        %1168 = vmatpush.bf16.msra.mxu0 %v1082
        %1169 = vmatpush.bf16.msra.mxu0 %v1080
        %1170 = vmatpush.bf16.msra.mxu0 %v1078
        %1171 = vmatpush.bf16.msra.mxu0 %v1076
        %1172 = vmatpush.bf16.msra.mxu0 %v1074
        %1173 = vmatpush.bf16.msra.mxu0 %v1072
        %1174 = vmatmul.bf16.gmra.mxu0 %v427
        %v1175 = vpop.f32.mrf.mxu0
        %v1176 = vadd.f32 %v1162, %v1175
        %v1177 = vpop.f32.mrf.mxu0
        %v1178 = vadd.f32 %v1164, %v1177
        %1179 = vdwg.mxu0
        %1180 = vmatpush.bf16.msra.mxu0 %v1102
        %1181 = vmatpush.bf16.msra.mxu0 %v1100
        %1182 = vmatpush.bf16.msra.mxu0 %v1098
        %1183 = vmatpush.bf16.msra.mxu0 %v1096
        %1184 = vmatpush.bf16.msra.mxu0 %v1094
        %1185 = vmatpush.bf16.msra.mxu0 %v1092
        %1186 = vmatpush.bf16.msra.mxu0 %v1090
        %1187 = vmatpush.bf16.msra.mxu0 %v1088
        %1188 = vmatmul.bf16.gmra.mxu0 %v428
        %v1189 = vpop.f32.mrf.mxu0
        %v1190 = vadd.f32 %v1176, %v1189
        %v1191 = vpop.f32.mrf.mxu0
        %v1192 = vadd.f32 %v1178, %v1191
        %1193 = vdwg.mxu0
        %1194 = vmatpush.bf16.msra.mxu0 %v1071
        %1195 = vmatpush.bf16.msra.mxu0 %v1069
        %1196 = vmatpush.bf16.msra.mxu0 %v1067
        %1197 = vmatpush.bf16.msra.mxu0 %v1065
        %1198 = vmatpush.bf16.msra.mxu0 %v1063
        %1199 = vmatpush.bf16.msra.mxu0 %v1061
        %1200 = vmatpush.bf16.msra.mxu0 %v1059
        %1201 = vmatpush.bf16.msra.mxu0 %v1057
        %1202 = vmatmul.bf16.gmra.mxu0 %v426
        %v1203 = vpop.f32.mrf.mxu0
        %v1204 = vadd.f32 %v909, %v1203
        %v1205 = vpop.f32.mrf.mxu0
        %v1206 = vadd.f32 %v909, %v1205
        %1207 = vdwg.mxu0
        %1208 = vmatpush.bf16.msra.mxu0 %v1087
        %1209 = vmatpush.bf16.msra.mxu0 %v1085
        %1210 = vmatpush.bf16.msra.mxu0 %v1083
        %1211 = vmatpush.bf16.msra.mxu0 %v1081
        %1212 = vmatpush.bf16.msra.mxu0 %v1079
        %1213 = vmatpush.bf16.msra.mxu0 %v1077
        %1214 = vmatpush.bf16.msra.mxu0 %v1075
        %1215 = vmatpush.bf16.msra.mxu0 %v1073
        %1216 = vmatmul.bf16.gmra.mxu0 %v427
        %v1217 = vpop.f32.mrf.mxu0
        %v1218 = vadd.f32 %v1204, %v1217
        %v1219 = vpop.f32.mrf.mxu0
        %v1220 = vadd.f32 %v1206, %v1219
        %1221 = vdwg.mxu0
        %1222 = vmatpush.bf16.msra.mxu0 %v1103
        %1223 = vmatpush.bf16.msra.mxu0 %v1101
        %1224 = vmatpush.bf16.msra.mxu0 %v1099
        %1225 = vmatpush.bf16.msra.mxu0 %v1097
        %1226 = vmatpush.bf16.msra.mxu0 %v1095
        %1227 = vmatpush.bf16.msra.mxu0 %v1093
        %1228 = vmatpush.bf16.msra.mxu0 %v1091
        %1229 = vmatpush.bf16.msra.mxu0 %v1089
        %1230 = vmatmul.bf16.gmra.mxu0 %v428
        %v1231 = vpop.f32.mrf.mxu0
        %v1232 = vadd.f32 %v1218, %v1231
        %v1233 = vpop.f32.mrf.mxu0
        %v1234 = vadd.f32 %v1220, %v1233
        %1235 = vdwg.mxu0
        %v1236 = vmul.f32 %v1190, %v1190
        %v1237 = vmul.f32 %v1232, %v1232
        %v1238 = vmul.f32 %v1192, %v1192
        %v1239 = vmul.f32 %v1234, %v1234
        %v1240 = vmul.f32 %v1190, 0.5
        %v1241 = vmul.f32 %v1232, 0.5
        %v1242 = vmul.f32 %v1192, 0.5
        %v1243 = vmul.f32 %v1234, 0.5
        %v1244 = vmul.f32 %v1190, 0.7978846
        %v1245 = vmul.f32 %v1232, 0.7978846
        %v1246 = vmul.f32 %v1192, 0.7978846
        %v1247 = vmul.f32 %v1234, 0.7978846
        %v1248 = vmul.f32 %v1236, 0.044715
        %v1249 = vmul.f32 %v1237, 0.044715
        %v1250 = vmul.f32 %v1238, 0.044715
        %v1251 = vmul.f32 %v1239, 0.044715
        %v1252 = vadd.f32 %v1248, 1.0
        %v1253 = vadd.f32 %v1249, 1.0
        %v1254 = vadd.f32 %v1250, 1.0
        %v1255 = vadd.f32 %v1251, 1.0
        %v1256 = vmul.f32 %v1244, %v1252
        %v1257 = vmul.f32 %v1245, %v1253
        %v1258 = vmul.f32 %v1246, %v1254
        %v1259 = vmul.f32 %v1247, %v1255
        %v1260 = vtanh.pop %v1256
        %v1261 = vtanh.pop %v1257
        %v1262 = vtanh.pop %v1258
        %v1263 = vtanh.pop %v1259
        %v1264 = vadd.f32 %v1260, 1.0
        %v1265 = vadd.f32 %v1261, 1.0
        %v1266 = vadd.f32 %v1262, 1.0
        %v1267 = vadd.f32 %v1263, 1.0
        %v1268 = vmul.f32 %v1240, %v1264
        %v1269 = vmul.f32 %v1241, %v1265
        %v1270 = vmul.f32 %v1242, %v1266
        %v1271 = vmul.f32 %v1243, %v1267
        %v1272 = vpack.c.bf16 %v1270, %v1268
        %v1273 = vpack.c.bf16 %v1271, %v1269
        %v1274 = vld [vmem:[%s287 + $0x180] sm:$0xff]
        %v1275 = vld [vmem:[%s287 + $0x188] sm:$0xf]
        %v1276 = vld [vmem:[%s287 + $0x18c] sm:$0xff]
        %v1277 = vld [vmem:[%s287 + $0x194] sm:$0xf]
        %v1278 = vld [vmem:[%s287 + $0x198] sm:$0xff]
        %v1279 = vld [vmem:[%s287 + $0x1a0] sm:$0xf]
        %v1280 = vld [vmem:[%s287 + $0x1a4] sm:$0xff]
        %v1281 = vld [vmem:[%s287 + $0x1ac] sm:$0xf]
        %v1282 = vld [vmem:[%s287 + $0x1b0] sm:$0xff]
        %v1283 = vld [vmem:[%s287 + $0x1b8] sm:$0xf]
        %v1284 = vld [vmem:[%s287 + $0x1bc] sm:$0xff]
        %v1285 = vld [vmem:[%s287 + $0x1c4] sm:$0xf]
        %v1286 = vld [vmem:[%s287 + $0x1c8] sm:$0xff]
        %v1287 = vld [vmem:[%s287 + $0x1d0] sm:$0xf]
        %v1288 = vld [vmem:[%s287 + $0x1d4] sm:$0xff]
        %v1289 = vld [vmem:[%s287 + $0x1dc] sm:$0xf]
        %v1290 = vld [vmem:[%s287 + $0x1e0] sm:$0xff]
        %v1291 = vld [vmem:[%s287 + $0x1e8] sm:$0xf]
        %v1292 = vld [vmem:[%s287 + $0x1ec] sm:$0xff]
        %v1293 = vld [vmem:[%s287 + $0x1f4] sm:$0xf]
        %v1294 = vld [vmem:[%s287 + $0x1f8] sm:$0xff]
        %v1295 = vld [vmem:[%s287 + $0x200] sm:$0xf]
        %v1296 = vld [vmem:[%s287 + $0x204] sm:$0xff]
        %v1297 = vld [vmem:[%s287 + $0x20c] sm:$0xf]
        %v1298 = vld [vmem:[%s287 + $0x210] sm:$0xff]
        %v1299 = vld [vmem:[%s287 + $0x218] sm:$0xf]
        %v1300 = vld [vmem:[%s287 + $0x21c] sm:$0xff]
        %v1301 = vld [vmem:[%s287 + $0x224] sm:$0xf]
        %v1302 = vld [vmem:[%s287 + $0x228] sm:$0xff]
        %v1303 = vld [vmem:[%s287 + $0x230] sm:$0xf]
        %v1304 = vld [vmem:[%s287 + $0x234] sm:$0xff]
        %v1305 = vld [vmem:[%s287 + $0x23c] sm:$0xf]
        %v1306 = vld [vmem:[%s287 + $0x240] sm:$0xff]
        %v1307 = vld [vmem:[%s287 + $0x248] sm:$0xf]
        %v1308 = vld [vmem:[%s287 + $0x24c] sm:$0xff]
        %v1309 = vld [vmem:[%s287 + $0x254] sm:$0xf]
        %v1310 = vld [vmem:[%s287 + $0x258] sm:$0xff]
        %v1311 = vld [vmem:[%s287 + $0x260] sm:$0xf]
        %v1312 = vld [vmem:[%s287 + $0x264] sm:$0xff]
        %v1313 = vld [vmem:[%s287 + $0x26c] sm:$0xf]
        %v1314 = vld [vmem:[%s287 + $0x270] sm:$0xff]
        %v1315 = vld [vmem:[%s287 + $0x278] sm:$0xf]
        %v1316 = vld [vmem:[%s287 + $0x27c] sm:$0xff]
        %v1317 = vld [vmem:[%s287 + $0x284] sm:$0xf]
        %v1318 = vld [vmem:[%s287 + $0x288] sm:$0xff]
        %v1319 = vld [vmem:[%s287 + $0x290] sm:$0xf]
        %v1320 = vld [vmem:[%s287 + $0x294] sm:$0xff]
        %v1321 = vld [vmem:[%s287 + $0x29c] sm:$0xf]
        %v1322 = vld [vmem:[%s287 + $0x2a0] sm:$0xff]
        %v1323 = vld [vmem:[%s287 + $0x2a8] sm:$0xf]
        %v1324 = vld [vmem:[%s287 + $0x2ac] sm:$0xff]
        %v1325 = vld [vmem:[%s287 + $0x2b4] sm:$0xf]
        %v1326 = vld [vmem:[%s287 + $0x2b8] sm:$0xff]
        %v1327 = vld [vmem:[%s287 + $0x2c0] sm:$0xf]
        %v1328 = vld [vmem:[%s287 + $0x2c4] sm:$0xff]
        %v1329 = vld [vmem:[%s287 + $0x2cc] sm:$0xf]
        %v1330 = vld [vmem:[%s287 + $0x2d0] sm:$0xff]
        %v1331 = vld [vmem:[%s287 + $0x2d8] sm:$0xf]
        %v1332 = vld [vmem:[%s287 + $0x2dc] sm:$0xff]
        %v1333 = vld [vmem:[%s287 + $0x2e4] sm:$0xf]
        %v1334 = vld [vmem:[%s287 + $0x2e8] sm:$0xff]
        %v1335 = vld [vmem:[%s287 + $0x2f0] sm:$0xf]
        %v1336 = vld [vmem:[%s287 + $0x2f4] sm:$0xff]
        %v1337 = vld [vmem:[%s287 + $0x2fc] sm:$0xf]
        %v1402 = vunpack.c.l.b16 %v1274
        %v1403 = vunpack.c.h.b16 %v1274
        %v1404 = vunpack.c.l.b16 %v1275
        %v1405 = vunpack.c.l.b16 %v1276
        %v1406 = vunpack.c.h.b16 %v1276
        %v1407 = vunpack.c.l.b16 %v1277
        %v1408 = vunpack.c.l.b16 %v1278
        %v1409 = vunpack.c.h.b16 %v1278
        %v1410 = vunpack.c.l.b16 %v1279
        %v1411 = vunpack.c.l.b16 %v1280
        %v1412 = vunpack.c.h.b16 %v1280
        %v1413 = vunpack.c.l.b16 %v1281
        %v1414 = vunpack.c.l.b16 %v1282
        %v1415 = vunpack.c.h.b16 %v1282
        %v1416 = vunpack.c.l.b16 %v1283
        %v1417 = vunpack.c.l.b16 %v1284
        %v1418 = vunpack.c.h.b16 %v1284
        %v1419 = vunpack.c.l.b16 %v1285
        %v1420 = vunpack.c.l.b16 %v1286
        %v1421 = vunpack.c.h.b16 %v1286
        %v1422 = vunpack.c.l.b16 %v1287
        %v1423 = vunpack.c.l.b16 %v1288
        %v1424 = vunpack.c.h.b16 %v1288
        %v1425 = vunpack.c.l.b16 %v1289
        %v1426 = vunpack.c.l.b16 %v1290
        %v1427 = vunpack.c.h.b16 %v1290
        %v1428 = vunpack.c.l.b16 %v1291
        %v1429 = vunpack.c.l.b16 %v1292
        %v1430 = vunpack.c.h.b16 %v1292
        %v1431 = vunpack.c.l.b16 %v1293
        %v1432 = vunpack.c.l.b16 %v1294
        %v1433 = vunpack.c.h.b16 %v1294
        %v1434 = vunpack.c.l.b16 %v1295
        %v1435 = vunpack.c.l.b16 %v1296
        %v1436 = vunpack.c.h.b16 %v1296
        %v1437 = vunpack.c.l.b16 %v1297
        %v1438 = vunpack.c.l.b16 %v1298
        %v1439 = vunpack.c.h.b16 %v1298
        %v1440 = vunpack.c.l.b16 %v1299
        %v1441 = vunpack.c.l.b16 %v1300
        %v1442 = vunpack.c.h.b16 %v1300
        %v1443 = vunpack.c.l.b16 %v1301
        %v1444 = vunpack.c.l.b16 %v1302
        %v1445 = vunpack.c.h.b16 %v1302
        %v1446 = vunpack.c.l.b16 %v1303
        %v1447 = vunpack.c.l.b16 %v1304
        %v1448 = vunpack.c.h.b16 %v1304
        %v1449 = vunpack.c.l.b16 %v1305
        %v1450 = vunpack.c.l.b16 %v1306
        %v1451 = vunpack.c.h.b16 %v1306
        %v1452 = vunpack.c.l.b16 %v1307
        %v1453 = vunpack.c.l.b16 %v1308
        %v1454 = vunpack.c.h.b16 %v1308
        %v1455 = vunpack.c.l.b16 %v1309
        %v1456 = vunpack.c.l.b16 %v1310
        %v1457 = vunpack.c.h.b16 %v1310
        %v1458 = vunpack.c.l.b16 %v1311
        %v1459 = vunpack.c.l.b16 %v1312
        %v1460 = vunpack.c.h.b16 %v1312
        %v1461 = vunpack.c.l.b16 %v1313
        %v1462 = vunpack.c.l.b16 %v1314
        %v1463 = vunpack.c.h.b16 %v1314
        %v1464 = vunpack.c.l.b16 %v1315
        %v1465 = vunpack.c.l.b16 %v1316
        %v1466 = vunpack.c.h.b16 %v1316
        %v1467 = vunpack.c.l.b16 %v1317
        %v1468 = vunpack.c.l.b16 %v1318
        %v1469 = vunpack.c.h.b16 %v1318
        %v1470 = vunpack.c.l.b16 %v1319
        %v1471 = vunpack.c.l.b16 %v1320
        %v1472 = vunpack.c.h.b16 %v1320
        %v1473 = vunpack.c.l.b16 %v1321
        %v1474 = vunpack.c.l.b16 %v1322
        %v1475 = vunpack.c.h.b16 %v1322
        %v1476 = vunpack.c.l.b16 %v1323
        %v1477 = vunpack.c.l.b16 %v1324
        %v1478 = vunpack.c.h.b16 %v1324
        %v1479 = vunpack.c.l.b16 %v1325
        %v1480 = vunpack.c.l.b16 %v1326
        %v1481 = vunpack.c.h.b16 %v1326
        %v1482 = vunpack.c.l.b16 %v1327
        %v1483 = vunpack.c.l.b16 %v1328
        %v1484 = vunpack.c.h.b16 %v1328
        %v1485 = vunpack.c.l.b16 %v1329
        %v1486 = vunpack.c.l.b16 %v1330
        %v1487 = vunpack.c.h.b16 %v1330
        %v1488 = vunpack.c.l.b16 %v1331
        %v1489 = vunpack.c.l.b16 %v1332
        %v1490 = vunpack.c.h.b16 %v1332
        %v1491 = vunpack.c.l.b16 %v1333
        %v1492 = vunpack.c.l.b16 %v1334
        %v1493 = vunpack.c.h.b16 %v1334
        %v1494 = vunpack.c.l.b16 %v1335
        %v1495 = vunpack.c.l.b16 %v1336
        %v1496 = vunpack.c.h.b16 %v1336
        %v1497 = vunpack.c.l.b16 %v1337
        %v1498 = vpack.c.b16 %v1405, %v1402
        %v1499 = vpack.c.b16 %v1406, %v1403
        %v1500 = vpack.c.b16 %v1407, %v1404
        %v1501 = vpack.c.b16 %v1411, %v1408
        %v1502 = vpack.c.b16 %v1412, %v1409
        %v1503 = vpack.c.b16 %v1413, %v1410
        %v1504 = vpack.c.b16 %v1417, %v1414
        %v1505 = vpack.c.b16 %v1418, %v1415
        %v1506 = vpack.c.b16 %v1419, %v1416
        %v1507 = vpack.c.b16 %v1423, %v1420
        %v1508 = vpack.c.b16 %v1424, %v1421
        %v1509 = vpack.c.b16 %v1425, %v1422
        %v1510 = vpack.c.b16 %v1429, %v1426
        %v1511 = vpack.c.b16 %v1430, %v1427
        %v1512 = vpack.c.b16 %v1431, %v1428
        %v1513 = vpack.c.b16 %v1435, %v1432
        %v1514 = vpack.c.b16 %v1436, %v1433
        %v1515 = vpack.c.b16 %v1437, %v1434
        %v1516 = vpack.c.b16 %v1441, %v1438
        %v1517 = vpack.c.b16 %v1442, %v1439
        %v1518 = vpack.c.b16 %v1443, %v1440
        %v1519 = vpack.c.b16 %v1447, %v1444
        %v1520 = vpack.c.b16 %v1448, %v1445
        %v1521 = vpack.c.b16 %v1449, %v1446
        %v1522 = vpack.c.b16 %v1453, %v1450
        %v1523 = vpack.c.b16 %v1454, %v1451
        %v1524 = vpack.c.b16 %v1455, %v1452
        %v1525 = vpack.c.b16 %v1459, %v1456
        %v1526 = vpack.c.b16 %v1460, %v1457
        %v1527 = vpack.c.b16 %v1461, %v1458
        %v1528 = vpack.c.b16 %v1465, %v1462
        %v1529 = vpack.c.b16 %v1466, %v1463
        %v1530 = vpack.c.b16 %v1467, %v1464
        %v1531 = vpack.c.b16 %v1471, %v1468
        %v1532 = vpack.c.b16 %v1472, %v1469
        %v1533 = vpack.c.b16 %v1473, %v1470
        %v1534 = vpack.c.b16 %v1477, %v1474
        %v1535 = vpack.c.b16 %v1478, %v1475
        %v1536 = vpack.c.b16 %v1479, %v1476
        %v1537 = vpack.c.b16 %v1483, %v1480
        %v1538 = vpack.c.b16 %v1484, %v1481
        %v1539 = vpack.c.b16 %v1485, %v1482
        %v1540 = vpack.c.b16 %v1489, %v1486
        %v1541 = vpack.c.b16 %v1490, %v1487
        %v1542 = vpack.c.b16 %v1491, %v1488
        %v1543 = vpack.c.b16 %v1495, %v1492
        %v1544 = vpack.c.b16 %v1496, %v1493
        %v1545 = vpack.c.b16 %v1497, %v1494
        %1594 = vmatpush.bf16.msra.mxu0 %v1519
        %1595 = vmatpush.bf16.msra.mxu0 %v1516
        %1596 = vmatpush.bf16.msra.mxu0 %v1513
        %1597 = vmatpush.bf16.msra.mxu0 %v1510
        %1598 = vmatpush.bf16.msra.mxu0 %v1507
        %1599 = vmatpush.bf16.msra.mxu0 %v1504
        %1600 = vmatpush.bf16.msra.mxu0 %v1501
        %1601 = vmatpush.bf16.msra.mxu0 %v1498
        %1602 = vmatmul.bf16.gmra.mxu0 %v1272
        %v1603 = vpop.f32.mrf.mxu0
        %v1604 = vadd.f32 0.0, %v1603
        %v1605 = vpop.f32.mrf.mxu0
        %v1606 = vadd.f32 0.0, %v1605
        %1607 = vdwg.mxu0
        %1608 = vmatpush.bf16.msra.mxu0 %v1543
        %1609 = vmatpush.bf16.msra.mxu0 %v1540
        %1610 = vmatpush.bf16.msra.mxu0 %v1537
        %1611 = vmatpush.bf16.msra.mxu0 %v1534
        %1612 = vmatpush.bf16.msra.mxu0 %v1531
        %1613 = vmatpush.bf16.msra.mxu0 %v1528
        %1614 = vmatpush.bf16.msra.mxu0 %v1525
        %1615 = vmatpush.bf16.msra.mxu0 %v1522
        %1616 = vmatmul.bf16.gmra.mxu0 %v1273
        %v1617 = vpop.f32.mrf.mxu0
        %v1618 = vadd.f32 %v1604, %v1617
        %v1619 = vpop.f32.mrf.mxu0
        %v1620 = vadd.f32 %v1606, %v1619
        %1621 = vdwg.mxu0
        %1622 = vmatpush.bf16.msra.mxu0 %v1520
        %1623 = vmatpush.bf16.msra.mxu0 %v1517
        %1624 = vmatpush.bf16.msra.mxu0 %v1514
        %1625 = vmatpush.bf16.msra.mxu0 %v1511
        %1626 = vmatpush.bf16.msra.mxu0 %v1508
        %1627 = vmatpush.bf16.msra.mxu0 %v1505
        %1628 = vmatpush.bf16.msra.mxu0 %v1502
        %1629 = vmatpush.bf16.msra.mxu0 %v1499
        %1630 = vmatmul.bf16.gmra.mxu0 %v1272
        %v1631 = vpop.f32.mrf.mxu0
        %v1632 = vadd.f32 0.0, %v1631
        %v1633 = vpop.f32.mrf.mxu0
        %v1634 = vadd.f32 0.0, %v1633
        %1635 = vdwg.mxu0
        %1636 = vmatpush.bf16.msra.mxu0 %v1544
        %1637 = vmatpush.bf16.msra.mxu0 %v1541
        %1638 = vmatpush.bf16.msra.mxu0 %v1538
        %1639 = vmatpush.bf16.msra.mxu0 %v1535
        %1640 = vmatpush.bf16.msra.mxu0 %v1532
        %1641 = vmatpush.bf16.msra.mxu0 %v1529
        %1642 = vmatpush.bf16.msra.mxu0 %v1526
        %1643 = vmatpush.bf16.msra.mxu0 %v1523
        %1644 = vmatmul.bf16.gmra.mxu0 %v1273
        %v1645 = vpop.f32.mrf.mxu0
        %v1646 = vadd.f32 %v1632, %v1645
        %v1647 = vpop.f32.mrf.mxu0
        %v1648 = vadd.f32 %v1634, %v1647
        %1649 = vdwg.mxu0
        %1650 = vmatpush.bf16.msra.mxu0 %v1521
        %1651 = vmatpush.bf16.msra.mxu0 %v1518
        %1652 = vmatpush.bf16.msra.mxu0 %v1515
        %1653 = vmatpush.bf16.msra.mxu0 %v1512
        %1654 = vmatpush.bf16.msra.mxu0 %v1509
        %1655 = vmatpush.bf16.msra.mxu0 %v1506
        %1656 = vmatpush.bf16.msra.mxu0 %v1503
        %1657 = vmatpush.bf16.msra.mxu0 %v1500
        %1658 = vmatmul.bf16.gmra.mxu0 %v1272
        %v1659 = vpop.f32.mrf.mxu0
        %v1660 = vadd.f32 0.0, %v1659
        %v1661 = vpop.f32.mrf.mxu0
        %v1662 = vadd.f32 0.0, %v1661
        %1663 = vdwg.mxu0
        %1664 = vmatpush.bf16.msra.mxu0 %v1545
        %1665 = vmatpush.bf16.msra.mxu0 %v1542
        %1666 = vmatpush.bf16.msra.mxu0 %v1539
        %1667 = vmatpush.bf16.msra.mxu0 %v1536
        %1668 = vmatpush.bf16.msra.mxu0 %v1533
        %1669 = vmatpush.bf16.msra.mxu0 %v1530
        %1670 = vmatpush.bf16.msra.mxu0 %v1527
        %1671 = vmatpush.bf16.msra.mxu0 %v1524
        %1672 = vmatmul.bf16.gmra.mxu0 %v1273
        %v1673 = vpop.f32.mrf.mxu0
        %v1674 = vadd.f32 %v1660, %v1673
        %v1675 = vpop.f32.mrf.mxu0
        %v1676 = vadd.f32 %v1662, %v1675
        %1677 = vdwg.mxu0
        %v1742 = vunpack.c.l.b16 %v794
        %v1743 = vunpack.c.h.b16 %v794
        %v1744 = vunpack.c.l.b16 %v795
        %v1745 = vunpack.c.l.b16 %v796
        %v1746 = vunpack.c.h.b16 %v796
        %v1747 = vunpack.c.l.b16 %v797
        %v1748 = vunpack.c.l.b16 %v798
        %v1749 = vunpack.c.h.b16 %v798
        %v1750 = vunpack.c.l.b16 %v799
        %v1751 = vunpack.c.l.b16 %v800
        %v1752 = vunpack.c.h.b16 %v800
        %v1753 = vunpack.c.l.b16 %v801
        %v1754 = vunpack.c.l.b16 %v802
        %v1755 = vunpack.c.h.b16 %v802
        %v1756 = vunpack.c.l.b16 %v803
        %v1757 = vunpack.c.l.b16 %v804
        %v1758 = vunpack.c.h.b16 %v804
        %v1759 = vunpack.c.l.b16 %v805
        %v1760 = vunpack.c.l.b16 %v806
        %v1761 = vunpack.c.h.b16 %v806
        %v1762 = vunpack.c.l.b16 %v807
        %v1763 = vunpack.c.l.b16 %v808
        %v1764 = vunpack.c.h.b16 %v808
        %v1765 = vunpack.c.l.b16 %v809
        %v1766 = vunpack.c.l.b16 %v810
        %v1767 = vunpack.c.h.b16 %v810
        %v1768 = vunpack.c.l.b16 %v811
        %v1769 = vunpack.c.l.b16 %v812
        %v1770 = vunpack.c.h.b16 %v812
        %v1771 = vunpack.c.l.b16 %v813
        %v1772 = vunpack.c.l.b16 %v814
        %v1773 = vunpack.c.h.b16 %v814
        %v1774 = vunpack.c.l.b16 %v815
        %v1775 = vunpack.c.l.b16 %v816
        %v1776 = vunpack.c.h.b16 %v816
        %v1777 = vunpack.c.l.b16 %v817
        %v1778 = vunpack.c.l.b16 %v818
        %v1779 = vunpack.c.h.b16 %v818
        %v1780 = vunpack.c.l.b16 %v819
        %v1781 = vunpack.c.l.b16 %v820
        %v1782 = vunpack.c.h.b16 %v820
        %v1783 = vunpack.c.l.b16 %v821
        %v1784 = vunpack.c.l.b16 %v822
        %v1785 = vunpack.c.h.b16 %v822
        %v1786 = vunpack.c.l.b16 %v823
        %v1787 = vunpack.c.l.b16 %v824
        %v1788 = vunpack.c.h.b16 %v824
        %v1789 = vunpack.c.l.b16 %v825
        %v1790 = vunpack.c.l.b16 %v826
        %v1791 = vunpack.c.h.b16 %v826
        %v1792 = vunpack.c.l.b16 %v827
        %v1793 = vunpack.c.l.b16 %v828
        %v1794 = vunpack.c.h.b16 %v828
        %v1795 = vunpack.c.l.b16 %v829
        %v1796 = vunpack.c.l.b16 %v830
        %v1797 = vunpack.c.h.b16 %v830
        %v1798 = vunpack.c.l.b16 %v831
        %v1799 = vunpack.c.l.b16 %v832
        %v1800 = vunpack.c.h.b16 %v832
        %v1801 = vunpack.c.l.b16 %v833
        %v1802 = vunpack.c.l.b16 %v834
        %v1803 = vunpack.c.h.b16 %v834
        %v1804 = vunpack.c.l.b16 %v835
        %v1805 = vunpack.c.l.b16 %v836
        %v1806 = vunpack.c.h.b16 %v836
        %v1807 = vunpack.c.l.b16 %v837
        %v1808 = vunpack.c.l.b16 %v838
        %v1809 = vunpack.c.h.b16 %v838
        %v1810 = vunpack.c.l.b16 %v839
        %v1811 = vunpack.c.l.b16 %v840
        %v1812 = vunpack.c.h.b16 %v840
        %v1813 = vunpack.c.l.b16 %v841
        %v1814 = vunpack.c.l.b16 %v842
        %v1815 = vunpack.c.h.b16 %v842
        %v1816 = vunpack.c.l.b16 %v843
        %v1817 = vunpack.c.l.b16 %v844
        %v1818 = vunpack.c.h.b16 %v844
        %v1819 = vunpack.c.l.b16 %v845
        %v1820 = vunpack.c.l.b16 %v846
        %v1821 = vunpack.c.h.b16 %v846
        %v1822 = vunpack.c.l.b16 %v847
        %v1823 = vunpack.c.l.b16 %v848
        %v1824 = vunpack.c.h.b16 %v848
        %v1825 = vunpack.c.l.b16 %v849
        %v1826 = vunpack.c.l.b16 %v850
        %v1827 = vunpack.c.h.b16 %v850
        %v1828 = vunpack.c.l.b16 %v851
        %v1829 = vunpack.c.l.b16 %v852
        %v1830 = vunpack.c.h.b16 %v852
        %v1831 = vunpack.c.l.b16 %v853
        %v1832 = vunpack.c.l.b16 %v854
        %v1833 = vunpack.c.h.b16 %v854
        %v1834 = vunpack.c.l.b16 %v855
        %v1835 = vunpack.c.l.b16 %v856
        %v1836 = vunpack.c.h.b16 %v856
        %v1837 = vunpack.c.l.b16 %v857
        %v1838 = vpack.c.b16 %v1745, %v1742
        %v1839 = vpack.c.b16 %v1746, %v1743
        %v1840 = vpack.c.b16 %v1747, %v1744
        %v1841 = vpack.c.b16 %v1751, %v1748
        %v1842 = vpack.c.b16 %v1752, %v1749
        %v1843 = vpack.c.b16 %v1753, %v1750
        %v1844 = vpack.c.b16 %v1757, %v1754
        %v1845 = vpack.c.b16 %v1758, %v1755
        %v1846 = vpack.c.b16 %v1759, %v1756
        %v1847 = vpack.c.b16 %v1763, %v1760
        %v1848 = vpack.c.b16 %v1764, %v1761
        %v1849 = vpack.c.b16 %v1765, %v1762
        %v1850 = vpack.c.b16 %v1769, %v1766
        %v1851 = vpack.c.b16 %v1770, %v1767
        %v1852 = vpack.c.b16 %v1771, %v1768
        %v1853 = vpack.c.b16 %v1775, %v1772
        %v1854 = vpack.c.b16 %v1776, %v1773
        %v1855 = vpack.c.b16 %v1777, %v1774
        %v1856 = vpack.c.b16 %v1781, %v1778
        %v1857 = vpack.c.b16 %v1782, %v1779
        %v1858 = vpack.c.b16 %v1783, %v1780
        %v1859 = vpack.c.b16 %v1787, %v1784
        %v1860 = vpack.c.b16 %v1788, %v1785
        %v1861 = vpack.c.b16 %v1789, %v1786
        %v1862 = vpack.c.b16 %v1793, %v1790
        %v1863 = vpack.c.b16 %v1794, %v1791
        %v1864 = vpack.c.b16 %v1795, %v1792
        %v1865 = vpack.c.b16 %v1799, %v1796
        %v1866 = vpack.c.b16 %v1800, %v1797
        %v1867 = vpack.c.b16 %v1801, %v1798
        %v1868 = vpack.c.b16 %v1805, %v1802
        %v1869 = vpack.c.b16 %v1806, %v1803
        %v1870 = vpack.c.b16 %v1807, %v1804
        %v1871 = vpack.c.b16 %v1811, %v1808
        %v1872 = vpack.c.b16 %v1812, %v1809
        %v1873 = vpack.c.b16 %v1813, %v1810
        %v1874 = vpack.c.b16 %v1817, %v1814
        %v1875 = vpack.c.b16 %v1818, %v1815
        %v1876 = vpack.c.b16 %v1819, %v1816
        %v1877 = vpack.c.b16 %v1823, %v1820
        %v1878 = vpack.c.b16 %v1824, %v1821
        %v1879 = vpack.c.b16 %v1825, %v1822
        %v1880 = vpack.c.b16 %v1829, %v1826
        %v1881 = vpack.c.b16 %v1830, %v1827
        %v1882 = vpack.c.b16 %v1831, %v1828
        %v1883 = vpack.c.b16 %v1835, %v1832
        %v1884 = vpack.c.b16 %v1836, %v1833
        %v1885 = vpack.c.b16 %v1837, %v1834
        %1934 = vmatpush.bf16.msra.mxu0 %v1859
        %1935 = vmatpush.bf16.msra.mxu0 %v1856
        %1936 = vmatpush.bf16.msra.mxu0 %v1853
        %1937 = vmatpush.bf16.msra.mxu0 %v1850
        %1938 = vmatpush.bf16.msra.mxu0 %v1847
        %1939 = vmatpush.bf16.msra.mxu0 %v1844
        %1940 = vmatpush.bf16.msra.mxu0 %v1841
        %1941 = vmatpush.bf16.msra.mxu0 %v1838
        %1942 = vmatmul.bf16.gmra.mxu0 %v792
        %v1943 = vpop.f32.mrf.mxu0
        %v1944 = vadd.f32 %v1618, %v1943
        %v1945 = vpop.f32.mrf.mxu0
        %v1946 = vadd.f32 %v1620, %v1945
        %1947 = vdwg.mxu0
        %1948 = vmatpush.bf16.msra.mxu0 %v1883
        %1949 = vmatpush.bf16.msra.mxu0 %v1880
        %1950 = vmatpush.bf16.msra.mxu0 %v1877
        %1951 = vmatpush.bf16.msra.mxu0 %v1874
        %1952 = vmatpush.bf16.msra.mxu0 %v1871
        %1953 = vmatpush.bf16.msra.mxu0 %v1868
        %1954 = vmatpush.bf16.msra.mxu0 %v1865
        %1955 = vmatpush.bf16.msra.mxu0 %v1862
        %1956 = vmatmul.bf16.gmra.mxu0 %v793
        %v1957 = vpop.f32.mrf.mxu0
        %v1958 = vadd.f32 %v1944, %v1957
        %v1959 = vpop.f32.mrf.mxu0
        %v1960 = vadd.f32 %v1946, %v1959
        %1961 = vdwg.mxu0
        %1962 = vmatpush.bf16.msra.mxu0 %v1860
        %1963 = vmatpush.bf16.msra.mxu0 %v1857
        %1964 = vmatpush.bf16.msra.mxu0 %v1854
        %1965 = vmatpush.bf16.msra.mxu0 %v1851
        %1966 = vmatpush.bf16.msra.mxu0 %v1848
        %1967 = vmatpush.bf16.msra.mxu0 %v1845
        %1968 = vmatpush.bf16.msra.mxu0 %v1842
        %1969 = vmatpush.bf16.msra.mxu0 %v1839
        %1970 = vmatmul.bf16.gmra.mxu0 %v792
        %v1971 = vpop.f32.mrf.mxu0
        %v1972 = vadd.f32 %v1646, %v1971
        %v1973 = vpop.f32.mrf.mxu0
        %v1974 = vadd.f32 %v1648, %v1973
        %1975 = vdwg.mxu0
        %1976 = vmatpush.bf16.msra.mxu0 %v1884
        %1977 = vmatpush.bf16.msra.mxu0 %v1881
        %1978 = vmatpush.bf16.msra.mxu0 %v1878
        %1979 = vmatpush.bf16.msra.mxu0 %v1875
        %1980 = vmatpush.bf16.msra.mxu0 %v1872
        %1981 = vmatpush.bf16.msra.mxu0 %v1869
        %1982 = vmatpush.bf16.msra.mxu0 %v1866
        %1983 = vmatpush.bf16.msra.mxu0 %v1863
        %1984 = vmatmul.bf16.gmra.mxu0 %v793
        %v1985 = vpop.f32.mrf.mxu0
        %v1986 = vadd.f32 %v1972, %v1985
        %v1987 = vpop.f32.mrf.mxu0
        %v1988 = vadd.f32 %v1974, %v1987
        %1989 = vdwg.mxu0
        %1990 = vmatpush.bf16.msra.mxu0 %v1861
        %1991 = vmatpush.bf16.msra.mxu0 %v1858
        %1992 = vmatpush.bf16.msra.mxu0 %v1855
        %1993 = vmatpush.bf16.msra.mxu0 %v1852
        %1994 = vmatpush.bf16.msra.mxu0 %v1849
        %1995 = vmatpush.bf16.msra.mxu0 %v1846
        %1996 = vmatpush.bf16.msra.mxu0 %v1843
        %1997 = vmatpush.bf16.msra.mxu0 %v1840
        %1998 = vmatmul.bf16.gmra.mxu0 %v792
        %v1999 = vpop.f32.mrf.mxu0
        %v2000 = vadd.f32 %v1674, %v1999
        %v2001 = vpop.f32.mrf.mxu0
        %v2002 = vadd.f32 %v1676, %v2001
        %2003 = vdwg.mxu0
        %2004 = vmatpush.bf16.msra.mxu0 %v1885
        %2005 = vmatpush.bf16.msra.mxu0 %v1882
        %2006 = vmatpush.bf16.msra.mxu0 %v1879
        %2007 = vmatpush.bf16.msra.mxu0 %v1876
        %2008 = vmatpush.bf16.msra.mxu0 %v1873
        %2009 = vmatpush.bf16.msra.mxu0 %v1870
        %2010 = vmatpush.bf16.msra.mxu0 %v1867
        %2011 = vmatpush.bf16.msra.mxu0 %v1864
        %2012 = vmatmul.bf16.gmra.mxu0 %v793
        %v2013 = vpop.f32.mrf.mxu0
        %v2014 = vadd.f32 %v2000, %v2013
        %v2015 = vpop.f32.mrf.mxu0
        %v2016 = vadd.f32 %v2002, %v2015
        %2017 = vdwg.mxu0
        %v2018 = vld [vmem:[%s277 + $0x10] sm:$0xff]
        %v2019 = vld [vmem:[%s277 + $0x28] sm:$0xff]
        %v2020 = vld [vmem:[%s277 + $0x40] sm:$0xff]
        %v2021 = vld [vmem:[%s277 + $0x58] sm:$0xff]
        %v2022 = vld [vmem:[%s277 + $0x70] sm:$0xff]
        %v2023 = vld [vmem:[%s277 + $0x88] sm:$0xff]
        %v2024 = vld [vmem:[%s277 + $0xa0] sm:$0xff]
        %v2025 = vld [vmem:[%s277 + $0xb8] sm:$0xff]
        %v2026 = vld [vmem:[%s277 + $0xd0] sm:$0xff]
        %v2027 = vld [vmem:[%s277 + $0xe8] sm:$0xff]
        %v2028 = vld [vmem:[%s277 + $0x100] sm:$0xff]
        %v2029 = vld [vmem:[%s277 + $0x118] sm:$0xff]
        %v2030 = vld [vmem:[%s277 + $0x130] sm:$0xff]
        %v2031 = vld [vmem:[%s277 + $0x148] sm:$0xff]
        %v2032 = vld [vmem:[%s277 + $0x160] sm:$0xff]
        %v2033 = vld [vmem:[%s277 + $0x178] sm:$0xff]
        %v2034 = vld [vmem:[%s277 + $0x190] sm:$0xff]
        %v2035 = vld [vmem:[%s277 + $0x1a8] sm:$0xff]
        %v2036 = vld [vmem:[%s277 + $0x1c0] sm:$0xff]
        %v2037 = vld [vmem:[%s277 + $0x1d8] sm:$0xff]
        %v2038 = vld [vmem:[%s277 + $0x1f0] sm:$0xff]
        %v2039 = vld [vmem:[%s277 + $0x208] sm:$0xff]
        %v2040 = vld [vmem:[%s277 + $0x220] sm:$0xff]
        %v2041 = vld [vmem:[%s277 + $0x238] sm:$0xff]
        %v2042 = vld [vmem:[%s277 + $0x250] sm:$0xff]
        %v2043 = vld [vmem:[%s277 + $0x268] sm:$0xff]
        %v2044 = vld [vmem:[%s277 + $0x280] sm:$0xff]
        %v2045 = vld [vmem:[%s277 + $0x298] sm:$0xff]
        %v2046 = vld [vmem:[%s277 + $0x2b0] sm:$0xff]
        %v2047 = vld [vmem:[%s277 + $0x2c8] sm:$0xff]
        %v2048 = vld [vmem:[%s277 + $0x2e0] sm:$0xff]
        %v2049 = vld [vmem:[%s277 + $0x2f8] sm:$0xff]
        %v2050 = vld [vmem:[%s277 + $0x310] sm:$0xff]
        %v2051 = vld [vmem:[%s277 + $0x328] sm:$0xff]
        %v2052 = vld [vmem:[%s277 + $0x340] sm:$0xff]
        %v2053 = vld [vmem:[%s277 + $0x358] sm:$0xff]
        %v2054 = vld [vmem:[%s277 + $0x370] sm:$0xff]
        %v2055 = vld [vmem:[%s277 + $0x388] sm:$0xff]
        %v2056 = vld [vmem:[%s277 + $0x3a0] sm:$0xff]
        %v2057 = vld [vmem:[%s277 + $0x3b8] sm:$0xff]
        %v2058 = vld [vmem:[%s277 + $0x3d0] sm:$0xff]
        %v2059 = vld [vmem:[%s277 + $0x3e8] sm:$0xff]
        %v2060 = vld [vmem:[%s277 + $0x400] sm:$0xff]
        %v2061 = vld [vmem:[%s277 + $0x418] sm:$0xff]
        %v2062 = vld [vmem:[%s277 + $0x430] sm:$0xff]
        %v2063 = vld [vmem:[%s277 + $0x448] sm:$0xff]
        %v2064 = vld [vmem:[%s277 + $0x460] sm:$0xff]
        %v2065 = vld [vmem:[%s277 + $0x478] sm:$0xff]
        %v2066 = vld [vmem:[%s336 + $0x4] sm:$0x3]
        %v2068 = vperm.slane %v2066, 0
        %v2069 = vperm.slane %v2066, 1
        %v2120 = vunpack.c.l.b16 %v2018
        %v2121 = vunpack.c.h.b16 %v2018
        %v2122 = vunpack.c.l.b16 %v2019
        %v2123 = vunpack.c.h.b16 %v2019
        %v2124 = vunpack.c.l.b16 %v2020
        %v2125 = vunpack.c.h.b16 %v2020
        %v2126 = vunpack.c.l.b16 %v2021
        %v2127 = vunpack.c.h.b16 %v2021
        %v2128 = vunpack.c.l.b16 %v2022
        %v2129 = vunpack.c.h.b16 %v2022
        %v2130 = vunpack.c.l.b16 %v2023
        %v2131 = vunpack.c.h.b16 %v2023
        %v2132 = vunpack.c.l.b16 %v2024
        %v2133 = vunpack.c.h.b16 %v2024
        %v2134 = vunpack.c.l.b16 %v2025
        %v2135 = vunpack.c.h.b16 %v2025
        %v2136 = vunpack.c.l.b16 %v2026
        %v2137 = vunpack.c.h.b16 %v2026
        %v2138 = vunpack.c.l.b16 %v2027
        %v2139 = vunpack.c.h.b16 %v2027
        %v2140 = vunpack.c.l.b16 %v2028
        %v2141 = vunpack.c.h.b16 %v2028
        %v2142 = vunpack.c.l.b16 %v2029
        %v2143 = vunpack.c.h.b16 %v2029
        %v2144 = vunpack.c.l.b16 %v2030
        %v2145 = vunpack.c.h.b16 %v2030
        %v2146 = vunpack.c.l.b16 %v2031
        %v2147 = vunpack.c.h.b16 %v2031
        %v2148 = vunpack.c.l.b16 %v2032
        %v2149 = vunpack.c.h.b16 %v2032
        %v2150 = vunpack.c.l.b16 %v2033
        %v2151 = vunpack.c.h.b16 %v2033
        %v2152 = vunpack.c.l.b16 %v2034
        %v2153 = vunpack.c.h.b16 %v2034
        %v2154 = vunpack.c.l.b16 %v2035
        %v2155 = vunpack.c.h.b16 %v2035
        %v2156 = vunpack.c.l.b16 %v2036
        %v2157 = vunpack.c.h.b16 %v2036
        %v2158 = vunpack.c.l.b16 %v2037
        %v2159 = vunpack.c.h.b16 %v2037
        %v2160 = vunpack.c.l.b16 %v2038
        %v2161 = vunpack.c.h.b16 %v2038
        %v2162 = vunpack.c.l.b16 %v2039
        %v2163 = vunpack.c.h.b16 %v2039
        %v2164 = vunpack.c.l.b16 %v2040
        %v2165 = vunpack.c.h.b16 %v2040
        %v2166 = vunpack.c.l.b16 %v2041
        %v2167 = vunpack.c.h.b16 %v2041
        %v2168 = vunpack.c.l.b16 %v2042
        %v2169 = vunpack.c.h.b16 %v2042
        %v2170 = vunpack.c.l.b16 %v2043
        %v2171 = vunpack.c.h.b16 %v2043
        %v2172 = vunpack.c.l.b16 %v2044
        %v2173 = vunpack.c.h.b16 %v2044
        %v2174 = vunpack.c.l.b16 %v2045
        %v2175 = vunpack.c.h.b16 %v2045
        %v2176 = vunpack.c.l.b16 %v2046
        %v2177 = vunpack.c.h.b16 %v2046
        %v2178 = vunpack.c.l.b16 %v2047
        %v2179 = vunpack.c.h.b16 %v2047
        %v2180 = vunpack.c.l.b16 %v2048
        %v2181 = vunpack.c.h.b16 %v2048
        %v2182 = vunpack.c.l.b16 %v2049
        %v2183 = vunpack.c.h.b16 %v2049
        %v2184 = vunpack.c.l.b16 %v2050
        %v2185 = vunpack.c.h.b16 %v2050
        %v2186 = vunpack.c.l.b16 %v2051
        %v2187 = vunpack.c.h.b16 %v2051
        %v2188 = vunpack.c.l.b16 %v2052
        %v2189 = vunpack.c.h.b16 %v2052
        %v2190 = vunpack.c.l.b16 %v2053
        %v2191 = vunpack.c.h.b16 %v2053
        %v2192 = vunpack.c.l.b16 %v2054
        %v2193 = vunpack.c.h.b16 %v2054
        %v2194 = vunpack.c.l.b16 %v2055
        %v2195 = vunpack.c.h.b16 %v2055
        %v2196 = vunpack.c.l.b16 %v2056
        %v2197 = vunpack.c.h.b16 %v2056
        %v2198 = vunpack.c.l.b16 %v2057
        %v2199 = vunpack.c.h.b16 %v2057
        %v2200 = vunpack.c.l.b16 %v2058
        %v2201 = vunpack.c.h.b16 %v2058
        %v2202 = vunpack.c.l.b16 %v2059
        %v2203 = vunpack.c.h.b16 %v2059
        %v2204 = vunpack.c.l.b16 %v2060
        %v2205 = vunpack.c.h.b16 %v2060
        %v2206 = vunpack.c.l.b16 %v2061
        %v2207 = vunpack.c.h.b16 %v2061
        %v2208 = vunpack.c.l.b16 %v2062
        %v2209 = vunpack.c.h.b16 %v2062
        %v2210 = vunpack.c.l.b16 %v2063
        %v2211 = vunpack.c.h.b16 %v2063
        %v2212 = vunpack.c.l.b16 %v2064
        %v2213 = vunpack.c.h.b16 %v2064
        %v2214 = vunpack.c.l.b16 %v2065
        %v2215 = vunpack.c.h.b16 %v2065
        %v2216 = vpack.c.b16 %v2122, %v2120
        %v2217 = vpack.c.b16 %v2123, %v2121
        %v2218 = vpack.c.b16 %v2126, %v2124
        %v2219 = vpack.c.b16 %v2127, %v2125
        %v2220 = vpack.c.b16 %v2130, %v2128
        %v2221 = vpack.c.b16 %v2131, %v2129
        %v2222 = vpack.c.b16 %v2134, %v2132
        %v2223 = vpack.c.b16 %v2135, %v2133
        %v2224 = vpack.c.b16 %v2138, %v2136
        %v2225 = vpack.c.b16 %v2139, %v2137
        %v2226 = vpack.c.b16 %v2142, %v2140
        %v2227 = vpack.c.b16 %v2143, %v2141
        %v2228 = vpack.c.b16 %v2146, %v2144
        %v2229 = vpack.c.b16 %v2147, %v2145
        %v2230 = vpack.c.b16 %v2150, %v2148
        %v2231 = vpack.c.b16 %v2151, %v2149
        %v2232 = vpack.c.b16 %v2154, %v2152
        %v2233 = vpack.c.b16 %v2155, %v2153
        %v2234 = vpack.c.b16 %v2158, %v2156
        %v2235 = vpack.c.b16 %v2159, %v2157
        %v2236 = vpack.c.b16 %v2162, %v2160
        %v2237 = vpack.c.b16 %v2163, %v2161
        %v2238 = vpack.c.b16 %v2166, %v2164
        %v2239 = vpack.c.b16 %v2167, %v2165
        %v2240 = vpack.c.b16 %v2170, %v2168
        %v2241 = vpack.c.b16 %v2171, %v2169
        %v2242 = vpack.c.b16 %v2174, %v2172
        %v2243 = vpack.c.b16 %v2175, %v2173
        %v2244 = vpack.c.b16 %v2178, %v2176
        %v2245 = vpack.c.b16 %v2179, %v2177
        %v2246 = vpack.c.b16 %v2182, %v2180
        %v2247 = vpack.c.b16 %v2183, %v2181
        %v2248 = vpack.c.b16 %v2186, %v2184
        %v2249 = vpack.c.b16 %v2187, %v2185
        %v2250 = vpack.c.b16 %v2190, %v2188
        %v2251 = vpack.c.b16 %v2191, %v2189
        %v2252 = vpack.c.b16 %v2194, %v2192
        %v2253 = vpack.c.b16 %v2195, %v2193
        %v2254 = vpack.c.b16 %v2198, %v2196
        %v2255 = vpack.c.b16 %v2199, %v2197
        %v2256 = vpack.c.b16 %v2202, %v2200
        %v2257 = vpack.c.b16 %v2203, %v2201
        %v2258 = vpack.c.b16 %v2206, %v2204
        %v2259 = vpack.c.b16 %v2207, %v2205
        %v2260 = vpack.c.b16 %v2210, %v2208
        %v2261 = vpack.c.b16 %v2211, %v2209
        %v2262 = vpack.c.b16 %v2214, %v2212
        %v2263 = vpack.c.b16 %v2215, %v2213
        %2312 = vmatpush.bf16.msra.mxu0 %v2230
        %2313 = vmatpush.bf16.msra.mxu0 %v2228
        %2314 = vmatpush.bf16.msra.mxu0 %v2226
        %2315 = vmatpush.bf16.msra.mxu0 %v2224
        %2316 = vmatpush.bf16.msra.mxu0 %v2222
        %2317 = vmatpush.bf16.msra.mxu0 %v2220
        %2318 = vmatpush.bf16.msra.mxu0 %v2218
        %2319 = vmatpush.bf16.msra.mxu0 %v2216
        %2320 = vmatmul.bf16.gmra.mxu0 %v426
        %v2321 = vpop.f32.mrf.mxu0
        %v2322 = vadd.f32 %v2068, %v2321
        %v2323 = vpop.f32.mrf.mxu0
        %v2324 = vadd.f32 %v2068, %v2323
        %2325 = vdwg.mxu0
        %2326 = vmatpush.bf16.msra.mxu0 %v2246
        %2327 = vmatpush.bf16.msra.mxu0 %v2244
        %2328 = vmatpush.bf16.msra.mxu0 %v2242
        %2329 = vmatpush.bf16.msra.mxu0 %v2240
        %2330 = vmatpush.bf16.msra.mxu0 %v2238
        %2331 = vmatpush.bf16.msra.mxu0 %v2236
        %2332 = vmatpush.bf16.msra.mxu0 %v2234
        %2333 = vmatpush.bf16.msra.mxu0 %v2232
        %2334 = vmatmul.bf16.gmra.mxu0 %v427
        %v2335 = vpop.f32.mrf.mxu0
        %v2336 = vadd.f32 %v2322, %v2335
        %v2337 = vpop.f32.mrf.mxu0
        %v2338 = vadd.f32 %v2324, %v2337
        %2339 = vdwg.mxu0
        %2340 = vmatpush.bf16.msra.mxu0 %v2262
        %2341 = vmatpush.bf16.msra.mxu0 %v2260
        %2342 = vmatpush.bf16.msra.mxu0 %v2258
        %2343 = vmatpush.bf16.msra.mxu0 %v2256
        %2344 = vmatpush.bf16.msra.mxu0 %v2254
        %2345 = vmatpush.bf16.msra.mxu0 %v2252
        %2346 = vmatpush.bf16.msra.mxu0 %v2250
        %2347 = vmatpush.bf16.msra.mxu0 %v2248
        %2348 = vmatmul.bf16.gmra.mxu0 %v428
        %v2349 = vpop.f32.mrf.mxu0
        %v2350 = vadd.f32 %v2336, %v2349
        %v2351 = vpop.f32.mrf.mxu0
        %v2352 = vadd.f32 %v2338, %v2351
        %2353 = vdwg.mxu0
        %2354 = vmatpush.bf16.msra.mxu0 %v2231
        %2355 = vmatpush.bf16.msra.mxu0 %v2229
        %2356 = vmatpush.bf16.msra.mxu0 %v2227
        %2357 = vmatpush.bf16.msra.mxu0 %v2225
        %2358 = vmatpush.bf16.msra.mxu0 %v2223
        %2359 = vmatpush.bf16.msra.mxu0 %v2221
        %2360 = vmatpush.bf16.msra.mxu0 %v2219
        %2361 = vmatpush.bf16.msra.mxu0 %v2217
        %2362 = vmatmul.bf16.gmra.mxu0 %v426
        %v2363 = vpop.f32.mrf.mxu0
        %v2364 = vadd.f32 %v2069, %v2363
        %v2365 = vpop.f32.mrf.mxu0
        %v2366 = vadd.f32 %v2069, %v2365
        %2367 = vdwg.mxu0
        %2368 = vmatpush.bf16.msra.mxu0 %v2247
        %2369 = vmatpush.bf16.msra.mxu0 %v2245
        %2370 = vmatpush.bf16.msra.mxu0 %v2243
        %2371 = vmatpush.bf16.msra.mxu0 %v2241
        %2372 = vmatpush.bf16.msra.mxu0 %v2239
        %2373 = vmatpush.bf16.msra.mxu0 %v2237
        %2374 = vmatpush.bf16.msra.mxu0 %v2235
        %2375 = vmatpush.bf16.msra.mxu0 %v2233
        %2376 = vmatmul.bf16.gmra.mxu0 %v427
        %v2377 = vpop.f32.mrf.mxu0
        %v2378 = vadd.f32 %v2364, %v2377
        %v2379 = vpop.f32.mrf.mxu0
        %v2380 = vadd.f32 %v2366, %v2379
        %2381 = vdwg.mxu0
        %2382 = vmatpush.bf16.msra.mxu0 %v2263
        %2383 = vmatpush.bf16.msra.mxu0 %v2261
        %2384 = vmatpush.bf16.msra.mxu0 %v2259
        %2385 = vmatpush.bf16.msra.mxu0 %v2257
        %2386 = vmatpush.bf16.msra.mxu0 %v2255
        %2387 = vmatpush.bf16.msra.mxu0 %v2253
        %2388 = vmatpush.bf16.msra.mxu0 %v2251
        %2389 = vmatpush.bf16.msra.mxu0 %v2249
        %2390 = vmatmul.bf16.gmra.mxu0 %v428
        %v2391 = vpop.f32.mrf.mxu0
        %v2392 = vadd.f32 %v2378, %v2391
        %v2393 = vpop.f32.mrf.mxu0
        %v2394 = vadd.f32 %v2380, %v2393
        %2395 = vdwg.mxu0
        %v2396 = vmul.f32 %v2350, %v2350
        %v2397 = vmul.f32 %v2392, %v2392
        %v2398 = vmul.f32 %v2352, %v2352
        %v2399 = vmul.f32 %v2394, %v2394
        %v2400 = vmul.f32 %v2350, 0.5
        %v2401 = vmul.f32 %v2392, 0.5
        %v2402 = vmul.f32 %v2352, 0.5
        %v2403 = vmul.f32 %v2394, 0.5
        %v2404 = vmul.f32 %v2350, 0.7978846
        %v2405 = vmul.f32 %v2392, 0.7978846
        %v2406 = vmul.f32 %v2352, 0.7978846
        %v2407 = vmul.f32 %v2394, 0.7978846
        %v2408 = vmul.f32 %v2396, 0.044715
        %v2409 = vmul.f32 %v2397, 0.044715
        %v2410 = vmul.f32 %v2398, 0.044715
        %v2411 = vmul.f32 %v2399, 0.044715
        %v2412 = vadd.f32 %v2408, 1.0
        %v2413 = vadd.f32 %v2409, 1.0
        %v2414 = vadd.f32 %v2410, 1.0
        %v2415 = vadd.f32 %v2411, 1.0
        %v2416 = vmul.f32 %v2404, %v2412
        %v2417 = vmul.f32 %v2405, %v2413
        %v2418 = vmul.f32 %v2406, %v2414
        %v2419 = vmul.f32 %v2407, %v2415
        %v2420 = vtanh.pop %v2416
        %v2421 = vtanh.pop %v2417
        %v2422 = vtanh.pop %v2418
        %v2423 = vtanh.pop %v2419
        %v2424 = vadd.f32 %v2420, 1.0
        %v2425 = vadd.f32 %v2421, 1.0
        %v2426 = vadd.f32 %v2422, 1.0
        %v2427 = vadd.f32 %v2423, 1.0
        %v2428 = vmul.f32 %v2400, %v2424
        %v2429 = vmul.f32 %v2401, %v2425
        %v2430 = vmul.f32 %v2402, %v2426
        %v2431 = vmul.f32 %v2403, %v2427
        %v2432 = vpack.c.bf16 %v2430, %v2428
        %v2433 = vpack.c.bf16 %v2431, %v2429
        %v2434 = vld [vmem:[%s287 + $0x300] sm:$0xff]
        %v2435 = vld [vmem:[%s287 + $0x308] sm:$0xf]
        %v2436 = vld [vmem:[%s287 + $0x30c] sm:$0xff]
        %v2437 = vld [vmem:[%s287 + $0x314] sm:$0xf]
        %v2438 = vld [vmem:[%s287 + $0x318] sm:$0xff]
        %v2439 = vld [vmem:[%s287 + $0x320] sm:$0xf]
        %v2440 = vld [vmem:[%s287 + $0x324] sm:$0xff]
        %v2441 = vld [vmem:[%s287 + $0x32c] sm:$0xf]
        %v2442 = vld [vmem:[%s287 + $0x330] sm:$0xff]
        %v2443 = vld [vmem:[%s287 + $0x338] sm:$0xf]
        %v2444 = vld [vmem:[%s287 + $0x33c] sm:$0xff]
        %v2445 = vld [vmem:[%s287 + $0x344] sm:$0xf]
        %v2446 = vld [vmem:[%s287 + $0x348] sm:$0xff]
        %v2447 = vld [vmem:[%s287 + $0x350] sm:$0xf]
        %v2448 = vld [vmem:[%s287 + $0x354] sm:$0xff]
        %v2449 = vld [vmem:[%s287 + $0x35c] sm:$0xf]
        %v2450 = vld [vmem:[%s287 + $0x360] sm:$0xff]
        %v2451 = vld [vmem:[%s287 + $0x368] sm:$0xf]
        %v2452 = vld [vmem:[%s287 + $0x36c] sm:$0xff]
        %v2453 = vld [vmem:[%s287 + $0x374] sm:$0xf]
        %v2454 = vld [vmem:[%s287 + $0x378] sm:$0xff]
        %v2455 = vld [vmem:[%s287 + $0x380] sm:$0xf]
        %v2456 = vld [vmem:[%s287 + $0x384] sm:$0xff]
        %v2457 = vld [vmem:[%s287 + $0x38c] sm:$0xf]
        %v2458 = vld [vmem:[%s287 + $0x390] sm:$0xff]
        %v2459 = vld [vmem:[%s287 + $0x398] sm:$0xf]
        %v2460 = vld [vmem:[%s287 + $0x39c] sm:$0xff]
        %v2461 = vld [vmem:[%s287 + $0x3a4] sm:$0xf]
        %v2462 = vld [vmem:[%s287 + $0x3a8] sm:$0xff]
        %v2463 = vld [vmem:[%s287 + $0x3b0] sm:$0xf]
        %v2464 = vld [vmem:[%s287 + $0x3b4] sm:$0xff]
        %v2465 = vld [vmem:[%s287 + $0x3bc] sm:$0xf]
        %v2466 = vld [vmem:[%s287 + $0x3c0] sm:$0xff]
        %v2467 = vld [vmem:[%s287 + $0x3c8] sm:$0xf]
        %v2468 = vld [vmem:[%s287 + $0x3cc] sm:$0xff]
        %v2469 = vld [vmem:[%s287 + $0x3d4] sm:$0xf]
        %v2470 = vld [vmem:[%s287 + $0x3d8] sm:$0xff]
        %v2471 = vld [vmem:[%s287 + $0x3e0] sm:$0xf]
        %v2472 = vld [vmem:[%s287 + $0x3e4] sm:$0xff]
        %v2473 = vld [vmem:[%s287 + $0x3ec] sm:$0xf]
        %v2474 = vld [vmem:[%s287 + $0x3f0] sm:$0xff]
        %v2475 = vld [vmem:[%s287 + $0x3f8] sm:$0xf]
        %v2476 = vld [vmem:[%s287 + $0x3fc] sm:$0xff]
        %v2477 = vld [vmem:[%s287 + $0x404] sm:$0xf]
        %v2478 = vld [vmem:[%s287 + $0x408] sm:$0xff]
        %v2479 = vld [vmem:[%s287 + $0x410] sm:$0xf]
        %v2480 = vld [vmem:[%s287 + $0x414] sm:$0xff]
        %v2481 = vld [vmem:[%s287 + $0x41c] sm:$0xf]
        %v2482 = vld [vmem:[%s287 + $0x420] sm:$0xff]
        %v2483 = vld [vmem:[%s287 + $0x428] sm:$0xf]
        %v2484 = vld [vmem:[%s287 + $0x42c] sm:$0xff]
        %v2485 = vld [vmem:[%s287 + $0x434] sm:$0xf]
        %v2486 = vld [vmem:[%s287 + $0x438] sm:$0xff]
        %v2487 = vld [vmem:[%s287 + $0x440] sm:$0xf]
        %v2488 = vld [vmem:[%s287 + $0x444] sm:$0xff]
        %v2489 = vld [vmem:[%s287 + $0x44c] sm:$0xf]
        %v2490 = vld [vmem:[%s287 + $0x450] sm:$0xff]
        %v2491 = vld [vmem:[%s287 + $0x458] sm:$0xf]
        %v2492 = vld [vmem:[%s287 + $0x45c] sm:$0xff]
        %v2493 = vld [vmem:[%s287 + $0x464] sm:$0xf]
        %v2494 = vld [vmem:[%s287 + $0x468] sm:$0xff]
        %v2495 = vld [vmem:[%s287 + $0x470] sm:$0xf]
        %v2496 = vld [vmem:[%s287 + $0x474] sm:$0xff]
        %v2497 = vld [vmem:[%s287 + $0x47c] sm:$0xf]
        %v2562 = vunpack.c.l.b16 %v2434
        %v2563 = vunpack.c.h.b16 %v2434
        %v2564 = vunpack.c.l.b16 %v2435
        %v2565 = vunpack.c.l.b16 %v2436
        %v2566 = vunpack.c.h.b16 %v2436
        %v2567 = vunpack.c.l.b16 %v2437
        %v2568 = vunpack.c.l.b16 %v2438
        %v2569 = vunpack.c.h.b16 %v2438
        %v2570 = vunpack.c.l.b16 %v2439
        %v2571 = vunpack.c.l.b16 %v2440
        %v2572 = vunpack.c.h.b16 %v2440
        %v2573 = vunpack.c.l.b16 %v2441
        %v2574 = vunpack.c.l.b16 %v2442
        %v2575 = vunpack.c.h.b16 %v2442
        %v2576 = vunpack.c.l.b16 %v2443
        %v2577 = vunpack.c.l.b16 %v2444
        %v2578 = vunpack.c.h.b16 %v2444
        %v2579 = vunpack.c.l.b16 %v2445
        %v2580 = vunpack.c.l.b16 %v2446
        %v2581 = vunpack.c.h.b16 %v2446
        %v2582 = vunpack.c.l.b16 %v2447
        %v2583 = vunpack.c.l.b16 %v2448
        %v2584 = vunpack.c.h.b16 %v2448
        %v2585 = vunpack.c.l.b16 %v2449
        %v2586 = vunpack.c.l.b16 %v2450
        %v2587 = vunpack.c.h.b16 %v2450
        %v2588 = vunpack.c.l.b16 %v2451
        %v2589 = vunpack.c.l.b16 %v2452
        %v2590 = vunpack.c.h.b16 %v2452
        %v2591 = vunpack.c.l.b16 %v2453
        %v2592 = vunpack.c.l.b16 %v2454
        %v2593 = vunpack.c.h.b16 %v2454
        %v2594 = vunpack.c.l.b16 %v2455
        %v2595 = vunpack.c.l.b16 %v2456
        %v2596 = vunpack.c.h.b16 %v2456
        %v2597 = vunpack.c.l.b16 %v2457
        %v2598 = vunpack.c.l.b16 %v2458
        %v2599 = vunpack.c.h.b16 %v2458
        %v2600 = vunpack.c.l.b16 %v2459
        %v2601 = vunpack.c.l.b16 %v2460
        %v2602 = vunpack.c.h.b16 %v2460
        %v2603 = vunpack.c.l.b16 %v2461
        %v2604 = vunpack.c.l.b16 %v2462
        %v2605 = vunpack.c.h.b16 %v2462
        %v2606 = vunpack.c.l.b16 %v2463
        %v2607 = vunpack.c.l.b16 %v2464
        %v2608 = vunpack.c.h.b16 %v2464
        %v2609 = vunpack.c.l.b16 %v2465
        %v2610 = vunpack.c.l.b16 %v2466
        %v2611 = vunpack.c.h.b16 %v2466
        %v2612 = vunpack.c.l.b16 %v2467
        %v2613 = vunpack.c.l.b16 %v2468
        %v2614 = vunpack.c.h.b16 %v2468
        %v2615 = vunpack.c.l.b16 %v2469
        %v2616 = vunpack.c.l.b16 %v2470
        %v2617 = vunpack.c.h.b16 %v2470
        %v2618 = vunpack.c.l.b16 %v2471
        %v2619 = vunpack.c.l.b16 %v2472
        %v2620 = vunpack.c.h.b16 %v2472
        %v2621 = vunpack.c.l.b16 %v2473
        %v2622 = vunpack.c.l.b16 %v2474
        %v2623 = vunpack.c.h.b16 %v2474
        %v2624 = vunpack.c.l.b16 %v2475
        %v2625 = vunpack.c.l.b16 %v2476
        %v2626 = vunpack.c.h.b16 %v2476
        %v2627 = vunpack.c.l.b16 %v2477
        %v2628 = vunpack.c.l.b16 %v2478
        %v2629 = vunpack.c.h.b16 %v2478
        %v2630 = vunpack.c.l.b16 %v2479
        %v2631 = vunpack.c.l.b16 %v2480
        %v2632 = vunpack.c.h.b16 %v2480
        %v2633 = vunpack.c.l.b16 %v2481
        %v2634 = vunpack.c.l.b16 %v2482
        %v2635 = vunpack.c.h.b16 %v2482
        %v2636 = vunpack.c.l.b16 %v2483
        %v2637 = vunpack.c.l.b16 %v2484
        %v2638 = vunpack.c.h.b16 %v2484
        %v2639 = vunpack.c.l.b16 %v2485
        %v2640 = vunpack.c.l.b16 %v2486
        %v2641 = vunpack.c.h.b16 %v2486
        %v2642 = vunpack.c.l.b16 %v2487
        %v2643 = vunpack.c.l.b16 %v2488
        %v2644 = vunpack.c.h.b16 %v2488
        %v2645 = vunpack.c.l.b16 %v2489
        %v2646 = vunpack.c.l.b16 %v2490
        %v2647 = vunpack.c.h.b16 %v2490
        %v2648 = vunpack.c.l.b16 %v2491
        %v2649 = vunpack.c.l.b16 %v2492
        %v2650 = vunpack.c.h.b16 %v2492
        %v2651 = vunpack.c.l.b16 %v2493
        %v2652 = vunpack.c.l.b16 %v2494
        %v2653 = vunpack.c.h.b16 %v2494
        %v2654 = vunpack.c.l.b16 %v2495
        %v2655 = vunpack.c.l.b16 %v2496
        %v2656 = vunpack.c.h.b16 %v2496
        %v2657 = vunpack.c.l.b16 %v2497
        %v2658 = vpack.c.b16 %v2565, %v2562
        %v2659 = vpack.c.b16 %v2566, %v2563
        %v2660 = vpack.c.b16 %v2567, %v2564
        %v2661 = vpack.c.b16 %v2571, %v2568
        %v2662 = vpack.c.b16 %v2572, %v2569
        %v2663 = vpack.c.b16 %v2573, %v2570
        %v2664 = vpack.c.b16 %v2577, %v2574
        %v2665 = vpack.c.b16 %v2578, %v2575
        %v2666 = vpack.c.b16 %v2579, %v2576
        %v2667 = vpack.c.b16 %v2583, %v2580
        %v2668 = vpack.c.b16 %v2584, %v2581
        %v2669 = vpack.c.b16 %v2585, %v2582
        %v2670 = vpack.c.b16 %v2589, %v2586
        %v2671 = vpack.c.b16 %v2590, %v2587
        %v2672 = vpack.c.b16 %v2591, %v2588
        %v2673 = vpack.c.b16 %v2595, %v2592
        %v2674 = vpack.c.b16 %v2596, %v2593
        %v2675 = vpack.c.b16 %v2597, %v2594
        %v2676 = vpack.c.b16 %v2601, %v2598
        %v2677 = vpack.c.b16 %v2602, %v2599
        %v2678 = vpack.c.b16 %v2603, %v2600
        %v2679 = vpack.c.b16 %v2607, %v2604
        %v2680 = vpack.c.b16 %v2608, %v2605
        %v2681 = vpack.c.b16 %v2609, %v2606
        %v2682 = vpack.c.b16 %v2613, %v2610
        %v2683 = vpack.c.b16 %v2614, %v2611
        %v2684 = vpack.c.b16 %v2615, %v2612
        %v2685 = vpack.c.b16 %v2619, %v2616
        %v2686 = vpack.c.b16 %v2620, %v2617
        %v2687 = vpack.c.b16 %v2621, %v2618
        %v2688 = vpack.c.b16 %v2625, %v2622
        %v2689 = vpack.c.b16 %v2626, %v2623
        %v2690 = vpack.c.b16 %v2627, %v2624
        %v2691 = vpack.c.b16 %v2631, %v2628
        %v2692 = vpack.c.b16 %v2632, %v2629
        %v2693 = vpack.c.b16 %v2633, %v2630
        %v2694 = vpack.c.b16 %v2637, %v2634
        %v2695 = vpack.c.b16 %v2638, %v2635
        %v2696 = vpack.c.b16 %v2639, %v2636
        %v2697 = vpack.c.b16 %v2643, %v2640
        %v2698 = vpack.c.b16 %v2644, %v2641
        %v2699 = vpack.c.b16 %v2645, %v2642
        %v2700 = vpack.c.b16 %v2649, %v2646
        %v2701 = vpack.c.b16 %v2650, %v2647
        %v2702 = vpack.c.b16 %v2651, %v2648
        %v2703 = vpack.c.b16 %v2655, %v2652
        %v2704 = vpack.c.b16 %v2656, %v2653
        %v2705 = vpack.c.b16 %v2657, %v2654
        %2754 = vmatpush.bf16.msra.mxu0 %v2679
        %2755 = vmatpush.bf16.msra.mxu0 %v2676
        %2756 = vmatpush.bf16.msra.mxu0 %v2673
        %2757 = vmatpush.bf16.msra.mxu0 %v2670
        %2758 = vmatpush.bf16.msra.mxu0 %v2667
        %2759 = vmatpush.bf16.msra.mxu0 %v2664
        %2760 = vmatpush.bf16.msra.mxu0 %v2661
        %2761 = vmatpush.bf16.msra.mxu0 %v2658
        %2762 = vmatmul.bf16.gmra.mxu0 %v2432
        %v2763 = vpop.f32.mrf.mxu0
        %v2764 = vadd.f32 0.0, %v2763
        %v2765 = vpop.f32.mrf.mxu0
        %v2766 = vadd.f32 0.0, %v2765
        %2767 = vdwg.mxu0
        %2768 = vmatpush.bf16.msra.mxu0 %v2703
        %2769 = vmatpush.bf16.msra.mxu0 %v2700
        %2770 = vmatpush.bf16.msra.mxu0 %v2697
        %2771 = vmatpush.bf16.msra.mxu0 %v2694
        %2772 = vmatpush.bf16.msra.mxu0 %v2691
        %2773 = vmatpush.bf16.msra.mxu0 %v2688
        %2774 = vmatpush.bf16.msra.mxu0 %v2685
        %2775 = vmatpush.bf16.msra.mxu0 %v2682
        %2776 = vmatmul.bf16.gmra.mxu0 %v2433
        %v2777 = vpop.f32.mrf.mxu0
        %v2778 = vadd.f32 %v2764, %v2777
        %v2779 = vpop.f32.mrf.mxu0
        %v2780 = vadd.f32 %v2766, %v2779
        %2781 = vdwg.mxu0
        %2782 = vmatpush.bf16.msra.mxu0 %v2680
        %2783 = vmatpush.bf16.msra.mxu0 %v2677
        %2784 = vmatpush.bf16.msra.mxu0 %v2674
        %2785 = vmatpush.bf16.msra.mxu0 %v2671
        %2786 = vmatpush.bf16.msra.mxu0 %v2668
        %2787 = vmatpush.bf16.msra.mxu0 %v2665
        %2788 = vmatpush.bf16.msra.mxu0 %v2662
        %2789 = vmatpush.bf16.msra.mxu0 %v2659
        %2790 = vmatmul.bf16.gmra.mxu0 %v2432
        %v2791 = vpop.f32.mrf.mxu0
        %v2792 = vadd.f32 0.0, %v2791
        %v2793 = vpop.f32.mrf.mxu0
        %v2794 = vadd.f32 0.0, %v2793
        %2795 = vdwg.mxu0
        %2796 = vmatpush.bf16.msra.mxu0 %v2704
        %2797 = vmatpush.bf16.msra.mxu0 %v2701
        %2798 = vmatpush.bf16.msra.mxu0 %v2698
        %2799 = vmatpush.bf16.msra.mxu0 %v2695
        %2800 = vmatpush.bf16.msra.mxu0 %v2692
        %2801 = vmatpush.bf16.msra.mxu0 %v2689
        %2802 = vmatpush.bf16.msra.mxu0 %v2686
        %2803 = vmatpush.bf16.msra.mxu0 %v2683
        %2804 = vmatmul.bf16.gmra.mxu0 %v2433
        %v2805 = vpop.f32.mrf.mxu0
        %v2806 = vadd.f32 %v2792, %v2805
        %v2807 = vpop.f32.mrf.mxu0
        %v2808 = vadd.f32 %v2794, %v2807
        %2809 = vdwg.mxu0
        %2810 = vmatpush.bf16.msra.mxu0 %v2681
        %2811 = vmatpush.bf16.msra.mxu0 %v2678
        %2812 = vmatpush.bf16.msra.mxu0 %v2675
        %2813 = vmatpush.bf16.msra.mxu0 %v2672
        %2814 = vmatpush.bf16.msra.mxu0 %v2669
        %2815 = vmatpush.bf16.msra.mxu0 %v2666
        %2816 = vmatpush.bf16.msra.mxu0 %v2663
        %2817 = vmatpush.bf16.msra.mxu0 %v2660
        %2818 = vmatmul.bf16.gmra.mxu0 %v2432
        %v2819 = vpop.f32.mrf.mxu0
        %v2820 = vadd.f32 0.0, %v2819
        %v2821 = vpop.f32.mrf.mxu0
        %v2822 = vadd.f32 0.0, %v2821
        %2823 = vdwg.mxu0
        %2824 = vmatpush.bf16.msra.mxu0 %v2705
        %2825 = vmatpush.bf16.msra.mxu0 %v2702
        %2826 = vmatpush.bf16.msra.mxu0 %v2699
        %2827 = vmatpush.bf16.msra.mxu0 %v2696
        %2828 = vmatpush.bf16.msra.mxu0 %v2693
        %2829 = vmatpush.bf16.msra.mxu0 %v2690
        %2830 = vmatpush.bf16.msra.mxu0 %v2687
        %2831 = vmatpush.bf16.msra.mxu0 %v2684
        %2832 = vmatmul.bf16.gmra.mxu0 %v2433
        %v2833 = vpop.f32.mrf.mxu0
        %v2834 = vadd.f32 %v2820, %v2833
        %v2835 = vpop.f32.mrf.mxu0
        %v2836 = vadd.f32 %v2822, %v2835
        %2837 = vdwg.mxu0
        %v2838 = vadd.f32 %v1958, %v2778
        %v2839 = vadd.f32 %v1986, %v2806
        %v2840 = vadd.f32 %v2014, %v2834
        %v2841 = vadd.f32 %v1960, %v2780
        %v2842 = vadd.f32 %v1988, %v2808
        %v2843 = vadd.f32 %v2016, %v2836
        %v2844 = vld [vmem:[#allocation7] sm:$0xff]
        %v2845 = vld [vmem:[#allocation7 + $0x8] sm:$0xff]
        %v2846 = vld [vmem:[#allocation7 + $0x10] sm:$0xff]
        %v2847 = vld [vmem:[#allocation7 + $0x18] sm:$0xff]
        %v2848 = vld [vmem:[#allocation7 + $0x20] sm:$0xff]
        %v2849 = vld [vmem:[#allocation7 + $0x28] sm:$0xff]
        %v2850 = vadd.f32 %v2844, %v2838
        %v2851 = vadd.f32 %v2845, %v2839
        %v2852 = vadd.f32 %v2846, %v2840
        %v2853 = vadd.f32 %v2847, %v2841
        %v2854 = vadd.f32 %v2848, %v2842
        %v2855 = vadd.f32 %v2849, %v2843
        %2856 = vst [vmem:[#allocation7] sm:$0xff] %v2850
        %2857 = vst [vmem:[#allocation7 + $0x8] sm:$0xff] %v2851
        %2858 = vst [vmem:[#allocation7 + $0x10] sm:$0xff] %v2852
        %2859 = vst [vmem:[#allocation7 + $0x18] sm:$0xff] %v2853
        %2860 = vst [vmem:[#allocation7 + $0x20] sm:$0xff] %v2854
        %2861 = vst [vmem:[#allocation7 + $0x28] sm:$0xff] %v2855
        // Predicated region
        $region53: #{mlp_forward.1} parent=39 // pred_check
          %p2862 = pneg %p178
        $region54: #{mlp_forward.1} parent=39 // pred_check_branch
          %2864 = sbr.rel (%p2862) target = $region56
        $region55: #{mlp_forward.1} parent=39 // pred_region
          %s2865 = smul.u32 2, %s27
          %2867 = vsyncadd [#allocation4], 0
          %s2868 = smul.addr %s2865, 3
          %s2869 = smul.addr %s2868, 8
          %s2870 = scalar_lea.hbm %s5, %s2869
          %s2871 = sshll.u32 [#allocation7], 4
          %s2872 = int_to_ptr.vmem [resolvable:$true] %s2871
          %s2873 = sshll.u32 %s2870, 4
          %s2874 = int_to_ptr.hbm [resolvable:$true] %s2873
          %2879 = dma.vmem_to_hbm [thread:$0]  %s2872, 768, %s2874, [#allocation4], 384, 384, 24
        $region56: #{mlp_forward.1} parent=39 // pred_fallthru
          _
        // Predicated region
        $region57: #{mlp_forward.1} parent=39 // pred_check
          %p2880 = pneg %p178
        $region58: #{mlp_forward.1} parent=39 // pred_check_branch
          %2882 = sbr.rel (%p2880) target = $region60
        $region59: #{mlp_forward.1} parent=39 // pred_region
          %2884 = dma.done [#allocation4], 768
        $region60: #{mlp_forward.1} parent=39 // pred_fallthru
          _
      $region40: #{mlp_forward.1} parent=5 // pred_fallthru
        _
      %p2885 = scmp.le.s32.totalorder 2, %s18
      // Predicated region
      $region61: #{mlp_forward.1} parent=5 // pred_check
        %p2886 = pneg %p2885
      $region62: #{mlp_forward.1} parent=5 // pred_check_branch
        %2888 = sbr.rel (%p2886) target = $region64
      $region63: #{mlp_forward.1} parent=5 // pred_region
        %s2889 = ssub.s32 %s18, 2
      $region64: #{mlp_forward.1} parent=5 // pred_fallthru
        _
    $region6: #{mlp_forward.1} parent=1 // loop_footer
      %s22 = sadd.s32 1, %s18
    $region7: #{mlp_forward.1} parent=1 // loop_footer_branch
      %17 = sbr.rel target = $region3
    $region8: #{mlp_forward.1} parent=1 // loop_exit
      _
    %2890 = vsyncpa [#allocation3], 1
    %s2891 = scalar_lea.sflag [#allocation3], 1
    %2892 = vsyncpa %s2891, 1
    %2893 = vsyncpa [#allocation6], 1
    %s2894 = scalar_lea.sflag [#allocation6], 1
    %2895 = vsyncpa %s2894, 1
    %2896 = vsyncpa [#allocation4], 1
    %s2897 = scalar_lea.sflag [#allocation4], 1
    %2898 = vsyncpa %s2897, 1

</llo_original>
